<compile_context>
chip_gen: v6e
topology: v6e:2x2x1
jax: 0.10.0
libtpu: 0.0.40
codegen_flags: <defaults>
</compile_context>

<pallas_src>
import functools

import numpy as np
import jax
import jax.numpy as jnp
from jax import lax
from jax.experimental import pallas as pl
from jax.experimental.pallas import tpu as pltpu


def _shift_rows(v, dh):
  """result[r, :] = v[r + dh, :], zero-filled where r + dh is out of range."""
  if dh == 0:
    return v
  rows, cols = v.shape
  pad = jnp.zeros((abs(dh), cols), v.dtype)
  if dh > 0:
    return jnp.concatenate([v[dh:, :], pad], axis=0)
  return jnp.concatenate([pad, v[:rows + dh, :]], axis=0)


def resblock_kernel(*refs, d1, d2, same_shape):
  if same_shape:
    (x_ref, sa_ref, ba_ref, w2a_ref, sb_ref, bb_ref, w2b_ref,
     out_ref, xbr_ref) = refs
    w1_ref = None
  else:
    (x_ref, sa_ref, ba_ref, w1_ref, w2a_ref, sb_ref, bb_ref, w2b_ref,
     out_ref, xbr_ref) = refs

  f32 = jnp.float32
  bf16 = jnp.bfloat16

  # ---- bn_branch2a (folded, eval mode) + relu_branch2a : lane-dense VPU ----
  x2 = x_ref[...].astype(f32)                                   # (H, W*Cin)
  t2 = jnp.maximum(x2 * sa_ref[...] + ba_ref[...], 0.0)
  xbr_ref[...] = t2.astype(xbr_ref.dtype)

  # ---- branch1 initializes the output accumulator ----
  if same_shape:
    acc = x2                                    # identity uses pre-BN input
  else:
    acc = jnp.dot(t2.astype(bf16), w1_ref[...],                 # 1x1 projection
                  preferred_element_type=f32)                   # (H, W*Cout)

  # ---- conv_branch2a: single matmul, K = 3*W*Cin ----
  p_a = jnp.concatenate(
      [_shift_rows(t2, (kh - 1) * d1) for kh in range(3)], axis=1)
  u = jnp.dot(p_a.astype(bf16), w2a_ref[...],
              preferred_element_type=f32)                       # (H, W*Cmid)

  # ---- bn_branch2b1 (folded) + relu_branch2b1 ----
  u = jnp.maximum(u * sb_ref[...] + bb_ref[...], 0.0)

  # ---- conv_branch2b1: single matmul, accumulated into the residual ----
  p_b = jnp.concatenate(
      [_shift_rows(u, (kh - 1) * d2) for kh in range(3)], axis=1)
  acc = acc + jnp.dot(p_b.astype(bf16), w2b_ref[...],
                      preferred_element_type=f32)               # (H, W*Cout)

  out_ref[...] = acc.astype(out_ref.dtype)


# --------------------- host-side weight folding helpers ---------------------

def _fold_conv3x3(w_hwio, W, d):
  """(3,3,Ci,Co) HWIO -> (3*W*Ci, W*Co): kw taps + channel mixing + W padding
  folded into a block-banded matrix; kh taps stay as 3 K-blocks."""
  w = np.asarray(w_hwio, np.float32)
  _, _, ci, co = w.shape
  out = np.zeros((3, W * ci, W * co), np.float32)
  for kh in range(3):
    for kw in range(3):
      off = (kw - 1) * d
      for wo in range(W):
        wp = wo + off
        if 0 <= wp < W:
          out[kh, wp * ci:(wp + 1) * ci, wo * co:(wo + 1) * co] = w[kh, kw]
  return jnp.asarray(out.reshape(3 * W * ci, W * co))


def _fold_conv1x1(w_io, W):
  """(Ci,Co) -> block-diagonal (W*Ci, W*Co) for the lane-dense 1x1 conv."""
  w = np.asarray(w_io, np.float32)
  ci, co = w.shape
  out = np.zeros((W * ci, W * co), np.float32)
  for wo in range(W):
    out[wo * ci:(wo + 1) * ci, wo * co:(wo + 1) * co] = w
  return jnp.asarray(out)


def resblock_forward(x, params, *, d1, d2, same_shape):
  """x: (N, H, W, Cin) f32; returns (out (N,H,W,Cout), x_bn_relu (N,H,W,Cin))."""
  N, H, W, Cin = x.shape
  scale_a, bias_a, w1, w2a, scale_b, bias_b, w2b = params
  Cmid = w2a.shape[-1]
  Cout = w2b.shape[-1]
  if same_shape:
    assert Cin == Cout, "identity shortcut requires Cin == Cout"

  Lin, Lmid, Lout = W * Cin, W * Cmid, W * Cout
  bf16 = jnp.bfloat16

  # lane-dense layout + pre-tiled BN params + folded bf16 weights (host side)
  x2 = x.reshape(N, H, Lin)
  sa_t = jnp.tile(jnp.asarray(scale_a, jnp.float32).reshape(1, Cin), (1, W))
  ba_t = jnp.tile(jnp.asarray(bias_a, jnp.float32).reshape(1, Cin), (1, W))
  sb_t = jnp.tile(jnp.asarray(scale_b, jnp.float32).reshape(1, Cmid), (1, W))
  bb_t = jnp.tile(jnp.asarray(bias_b, jnp.float32).reshape(1, Cmid), (1, W))
  w2a_f = _fold_conv3x3(w2a, W, d1).astype(bf16)        # (3*Lin, Lmid)
  w2b_f = _fold_conv3x3(w2b, W, d2).astype(bf16)        # (3*Lmid, Lout)

  inputs = [x2, sa_t, ba_t]
  in_specs = [
      pl.BlockSpec((None, H, Lin), lambda n: (n, 0, 0)),    # x (lane-dense)
      pl.BlockSpec((1, Lin), lambda n: (0, 0)),             # BN scale (tiled)
      pl.BlockSpec((1, Lin), lambda n: (0, 0)),             # BN bias  (tiled)
  ]
  if not same_shape:
    w1_f = _fold_conv1x1(w1, W).astype(bf16)                # (Lin, Lout)
    inputs.append(w1_f)
    in_specs.append(pl.BlockSpec((Lin, Lout), lambda n: (0, 0)))
  inputs += [w2a_f, sb_t, bb_t, w2b_f]
  in_specs += [
      pl.BlockSpec((3 * Lin, Lmid), lambda n: (0, 0)),
      pl.BlockSpec((1, Lmid), lambda n: (0, 0)),
      pl.BlockSpec((1, Lmid), lambda n: (0, 0)),
      pl.BlockSpec((3 * Lmid, Lout), lambda n: (0, 0)),
  ]

  flops = 2 * N * H * W * (9 * Cin * Cmid + 9 * Cmid * Cout
                           + (0 if same_shape else Cin * Cout))
  bytes_accessed = ((2 * N * H * Lin + N * H * Lout) * 4
                    + (3 * Lin * Lmid + 3 * Lmid * Lout
                       + (0 if same_shape else Lin * Lout)) * 2
                    + (2 * Lin + 2 * Lmid) * 4)

  kernel = functools.partial(resblock_kernel, d1=d1, d2=d2,
                             same_shape=same_shape)

  out2, xbr2 = pl.pallas_call(
      kernel,
      out_shape=(jax.ShapeDtypeStruct((N, H, Lout), x.dtype),
                 jax.ShapeDtypeStruct((N, H, Lin), x.dtype)),
      grid_spec=pltpu.PrefetchScalarGridSpec(
          num_scalar_prefetch=0,
          grid=(N,),
          in_specs=in_specs,
          out_specs=[
              pl.BlockSpec((None, H, Lout), lambda n: (n, 0, 0)),  # out
              pl.BlockSpec((None, H, Lin), lambda n: (n, 0, 0)),   # x_bn_relu
          ]),
      compiler_params=pltpu.CompilerParams(
          dimension_semantics=("parallel",),
          vmem_limit_bytes=32 * 1024 * 1024),
      cost_estimate=pl.CostEstimate(flops=flops, transcendentals=0,
                                    bytes_accessed=bytes_accessed),
  )(*inputs)
  return out2.reshape(N, H, W, Cout), xbr2.reshape(N, H, W, Cin)


# ---------------- parameter construction + pure-JAX reference ----------------

def make_params(key, Cin, Cmid, Cout, eps=1e-5):
  ks = jax.random.split(key, 10)
  g_a = jax.random.uniform(ks[0], (Cin,), jnp.float32, 0.5, 1.5)
  b_a = jax.random.normal(ks[1], (Cin,), jnp.float32) * 0.1
  m_a = jax.random.normal(ks[2], (Cin,), jnp.float32) * 0.1
  v_a = jax.random.uniform(ks[3], (Cin,), jnp.float32, 0.5, 1.5)
  g_b = jax.random.uniform(ks[4], (Cmid,), jnp.float32, 0.5, 1.5)
  b_b = jax.random.normal(ks[5], (Cmid,), jnp.float32) * 0.1
  m_b = jax.random.normal(ks[6], (Cmid,), jnp.float32) * 0.1
  v_b = jax.random.uniform(ks[7], (Cmid,), jnp.float32, 0.5, 1.5)
  w2a = jax.random.normal(ks[8], (3, 3, Cin, Cmid), jnp.float32) * 0.1
  w2b = jax.random.normal(ks[9], (3, 3, Cmid, Cout), jnp.float32) * 0.1
  w1 = jax.random.normal(jax.random.fold_in(key, 123),
                         (Cin, Cout), jnp.float32) * 0.1

  scale_a = g_a / jnp.sqrt(v_a + eps)
  bias_a = b_a - m_a * scale_a
  scale_b = g_b / jnp.sqrt(v_b + eps)
  bias_b = b_b - m_b * scale_b
  return (scale_a, bias_a, w1, w2a, scale_b, bias_b, w2b)


def _conv3x3_ref(x, w, d):
  return lax.conv_general_dilated(
      x, w, window_strides=(1, 1), padding=[(d, d), (d, d)],
      rhs_dilation=(d, d), dimension_numbers=('NHWC', 'HWIO', 'NHWC'),
      preferred_element_type=jnp.float32)


def resblock_ref(x, params, *, d1, d2, same_shape):
  """Pure-JAX reference using the same bf16-operand / f32-accum precision."""
  scale_a, bias_a, w1, w2a, scale_b, bias_b, w2b = params
  bf16 = jnp.bfloat16
  t = jnp.maximum(x * scale_a.reshape(1, 1, 1, -1)
                  + bias_a.reshape(1, 1, 1, -1), 0.0)
  if same_shape:
    branch1 = x
  else:
    branch1 = jnp.einsum('nhwc,co->nhwo', t.astype(bf16), w1.astype(bf16),
                         preferred_element_type=jnp.float32)
  b2 = _conv3x3_ref(t.astype(bf16), w2a.astype(bf16), d1)
  b2 = jnp.maximum(b2 * scale_b.reshape(1, 1, 1, -1)
                   + bias_b.reshape(1, 1, 1, -1), 0.0)
  b2 = _conv3x3_ref(b2.astype(bf16), w2b.astype(bf16), d2)
  return b2 + branch1, t


if __name__ == "__main__":
  key = jax.random.PRNGKey(0)
  N, H, W = 2, 16, 16
  d1, d2 = 1, 2   # first_dilation_padding=1, dilation_padding=2 (stride 1)

  # Case 1: in_channels != out_channels (conv_branch1 projection path)
  Cin, Cmid, Cout = 8, 16, 32
  kx, kp = jax.random.split(key)
  x = jax.random.normal(kx, (N, H, W, Cin), jnp.float32)
  params = make_params(kp, Cin, Cmid, Cout)
  out, xbr = resblock_forward(x, params, d1=d1, d2=d2, same_shape=False)
  out, xbr = jax.block_until_ready(out), jax.block_until_ready(xbr)
  out_r, xbr_r = resblock_ref(x, params, d1=d1, d2=d2, same_shape=False)
  assert jnp.allclose(out, out_r, atol=5e-3, rtol=5e-3), "projection-path output mismatch"
  assert jnp.allclose(xbr, xbr_r, atol=1e-5, rtol=1e-5), "x_bn_relu mismatch"

  # Case 2: in_channels == out_channels (identity shortcut path)
  Cin2, Cmid2, Cout2 = 8, 16, 8
  kx2, kp2 = jax.random.split(jax.random.fold_in(key, 7))
  xb = jax.random.normal(kx2, (N, H, W, Cin2), jnp.float32)
  params2 = make_params(kp2, Cin2, Cmid2, Cout2)
  outb, xbrb = resblock_forward(xb, params2, d1=d1, d2=d2, same_shape=True)
  outb, xbrb = jax.block_until_ready(outb), jax.block_until_ready(xbrb)
  outb_r, xbrb_r = resblock_ref(xb, params2, d1=d1, d2=d2, same_shape=True)
  assert jnp.allclose(outb, outb_r, atol=5e-3, rtol=5e-3), "identity-path output mismatch"
  assert jnp.allclose(xbrb, xbrb_r, atol=1e-5, rtol=1e-5), "x_bn_relu mismatch (identity)"

  print("KERNEL_OK")
</pallas_src>

<mosaic_0001>
module attributes {stable_mosaic.version = 11 : i64} {
  func.func @resblock_kernel(%arg0: i32, %arg1: memref<1x16x128xf32, #tpu.memory_space<vmem>>, %arg2: memref<1x128xf32, #tpu.memory_space<vmem>>, %arg3: memref<1x128xf32, #tpu.memory_space<vmem>>, %arg4: memref<128x512xbf16, #tpu.memory_space<vmem>>, %arg5: memref<384x256xbf16, #tpu.memory_space<vmem>>, %arg6: memref<1x256xf32, #tpu.memory_space<vmem>>, %arg7: memref<1x256xf32, #tpu.memory_space<vmem>>, %arg8: memref<768x512xbf16, #tpu.memory_space<vmem>>, %arg9: memref<1x16x512xf32, #tpu.memory_space<vmem>>, %arg10: memref<1x16x128xf32, #tpu.memory_space<vmem>>) attributes {dimension_semantics = [#tpu.dimension_semantics<parallel>], iteration_bounds = array<i64: 2>, scalar_prefetch = 0 : i64, scratch_operands = 0 : i64, tpu.core_type = #tpu.core_type<tc>, window_params = [{transform_indices = @transform_0, window_bounds = array<i64: 1, 16, 128>}, {pipeline_mode = #tpu.pipeline_mode<synchronous>, transform_indices = @transform_1, window_bounds = array<i64: 1, 128>}, {pipeline_mode = #tpu.pipeline_mode<synchronous>, transform_indices = @transform_2, window_bounds = array<i64: 1, 128>}, {pipeline_mode = #tpu.pipeline_mode<synchronous>, transform_indices = @transform_3, window_bounds = array<i64: 128, 512>}, {pipeline_mode = #tpu.pipeline_mode<synchronous>, transform_indices = @transform_4, window_bounds = array<i64: 384, 256>}, {pipeline_mode = #tpu.pipeline_mode<synchronous>, transform_indices = @transform_5, window_bounds = array<i64: 1, 256>}, {pipeline_mode = #tpu.pipeline_mode<synchronous>, transform_indices = @transform_6, window_bounds = array<i64: 1, 256>}, {pipeline_mode = #tpu.pipeline_mode<synchronous>, transform_indices = @transform_7, window_bounds = array<i64: 768, 512>}, {transform_indices = @transform_8, window_bounds = array<i64: 1, 16, 512>}, {transform_indices = @transform_9, window_bounds = array<i64: 1, 16, 128>}]} {
    %c0 = arith.constant 0 : index
    %c0_0 = arith.constant 0 : index
    %c0_1 = arith.constant 0 : index
    %0 = vector.load %arg1[%c0, %c0_0, %c0_1] : memref<1x16x128xf32, #tpu.memory_space<vmem>>, vector<1x16x128xf32>
    %1 = vector.shape_cast %0 : vector<1x16x128xf32> to vector<16x128xf32>
    %c0_2 = arith.constant 0 : index
    %c0_3 = arith.constant 0 : index
    %2 = vector.load %arg2[%c0_2, %c0_3] : memref<1x128xf32, #tpu.memory_space<vmem>>, vector<1x128xf32>
    %3 = vector.broadcast %2 : vector<1x128xf32> to vector<16x128xf32>
    %4 = arith.mulf %1, %3 : vector<16x128xf32>
    %c0_4 = arith.constant 0 : index
    %c0_5 = arith.constant 0 : index
    %5 = vector.load %arg3[%c0_4, %c0_5] : memref<1x128xf32, #tpu.memory_space<vmem>>, vector<1x128xf32>
    %6 = vector.broadcast %5 : vector<1x128xf32> to vector<16x128xf32>
    %7 = arith.addf %4, %6 : vector<16x128xf32>
    %cst = arith.constant 0.000000e+00 : f32
    %8 = vector.broadcast %cst : f32 to vector<16x128xf32>
    %9 = arith.maximumf %7, %8 : vector<16x128xf32>
    %c0_6 = arith.constant 0 : index
    %c0_7 = arith.constant 0 : index
    %c0_8 = arith.constant 0 : index
    %10 = vector.load %arg10[%c0_6, %c0_7, %c0_8] : memref<1x16x128xf32, #tpu.memory_space<vmem>>, vector<1x16x128xf32>
    %11 = vector.shape_cast %10 : vector<1x16x128xf32> to vector<16x128xf32>
    %12 = vector.shape_cast %9 : vector<16x128xf32> to vector<1x16x128xf32>
    tpu.vector_store %arg10[%c0_6, %c0_7, %c0_8], %12 {strides = array<i32>} : memref<1x16x128xf32, #tpu.memory_space<vmem>>, vector<1x16x128xf32>,
    %13 = arith.truncf %9 : vector<16x128xf32> to vector<16x128xbf16>
    %c0_9 = arith.constant 0 : index
    %c0_10 = arith.constant 0 : index
    %14 = vector.load %arg4[%c0_9, %c0_10] : memref<128x512xbf16, #tpu.memory_space<vmem>>, vector<128x512xbf16>
    %cst_11 = arith.constant dense<0.000000e+00> : vector<16x512xf32>
    %15 = tpu.matmul %13, %14, %cst_11 {dimension_numbers = #tpu.dot_dimension_numbers<[1], [0], [0], [1], [0, 0, 1, 1], [], []>} : vector<16x128xbf16>, vector<128x512xbf16>, vector<16x512xf32> -> vector<16x512xf32>
    %cst_12 = arith.constant 0.000000e+00 : f32
    %16 = vector.broadcast %cst_12 : f32 to vector<1x128xf32>
    %17 = vector.extract_strided_slice %9 {offsets = [0, 0], sizes = [15, 128], strides = [1, 1]} : vector<16x128xf32> to vector<15x128xf32>
    %18 = tpu.concatenate %16, %17 in 0 : vector<1x128xf32>, vector<15x128xf32> -> vector<16x128xf32>
    %cst_13 = arith.constant 0.000000e+00 : f32
    %19 = vector.broadcast %cst_13 : f32 to vector<1x128xf32>
    %20 = vector.extract_strided_slice %9 {offsets = [1, 0], sizes = [15, 128], strides = [1, 1]} : vector<16x128xf32> to vector<15x128xf32>
    %21 = tpu.concatenate %20, %19 in 0 : vector<15x128xf32>, vector<1x128xf32> -> vector<16x128xf32>
    %22 = tpu.concatenate %18, %9, %21 in 1 : vector<16x128xf32>, vector<16x128xf32>, vector<16x128xf32> -> vector<16x384xf32>
    %23 = arith.truncf %22 : vector<16x384xf32> to vector<16x384xbf16>
    %c0_14 = arith.constant 0 : index
    %c0_15 = arith.constant 0 : index
    %24 = vector.load %arg5[%c0_14, %c0_15] : memref<384x256xbf16, #tpu.memory_space<vmem>>, vector<384x256xbf16>
    %cst_16 = arith.constant dense<0.000000e+00> : vector<16x256xf32>
    %25 = tpu.matmul %23, %24, %cst_16 {dimension_numbers = #tpu.dot_dimension_numbers<[1], [0], [0], [1], [0, 0, 1, 1], [], []>} : vector<16x384xbf16>, vector<384x256xbf16>, vector<16x256xf32> -> vector<16x256xf32>
    %c0_17 = arith.constant 0 : index
    %c0_18 = arith.constant 0 : index
    %26 = vector.load %arg6[%c0_17, %c0_18] : memref<1x256xf32, #tpu.memory_space<vmem>>, vector<1x256xf32>
    %27 = vector.broadcast %26 : vector<1x256xf32> to vector<16x256xf32>
    %28 = arith.mulf %25, %27 : vector<16x256xf32>
    %c0_19 = arith.constant 0 : index
    %c0_20 = arith.constant 0 : index
    %29 = vector.load %arg7[%c0_19, %c0_20] : memref<1x256xf32, #tpu.memory_space<vmem>>, vector<1x256xf32>
    %30 = vector.broadcast %29 : vector<1x256xf32> to vector<16x256xf32>
    %31 = arith.addf %28, %30 : vector<16x256xf32>
    %cst_21 = arith.constant 0.000000e+00 : f32
    %32 = vector.broadcast %cst_21 : f32 to vector<16x256xf32>
    %33 = arith.maximumf %31, %32 : vector<16x256xf32>
    %cst_22 = arith.constant 0.000000e+00 : f32
    %34 = vector.broadcast %cst_22 : f32 to vector<2x256xf32>
    %35 = vector.extract_strided_slice %33 {offsets = [0, 0], sizes = [14, 256], strides = [1, 1]} : vector<16x256xf32> to vector<14x256xf32>
    %36 = tpu.concatenate %34, %35 in 0 : vector<2x256xf32>, vector<14x256xf32> -> vector<16x256xf32>
    %cst_23 = arith.constant 0.000000e+00 : f32
    %37 = vector.broadcast %cst_23 : f32 to vector<2x256xf32>
    %38 = vector.extract_strided_slice %33 {offsets = [2, 0], sizes = [14, 256], strides = [1, 1]} : vector<16x256xf32> to vector<14x256xf32>
    %39 = tpu.concatenate %38, %37 in 0 : vector<14x256xf32>, vector<2x256xf32> -> vector<16x256xf32>
    %40 = tpu.concatenate %36, %33, %39 in 1 : vector<16x256xf32>, vector<16x256xf32>, vector<16x256xf32> -> vector<16x768xf32>
    %41 = arith.truncf %40 : vector<16x768xf32> to vector<16x768xbf16>
    %c0_24 = arith.constant 0 : index
    %c0_25 = arith.constant 0 : index
    %42 = vector.load %arg8[%c0_24, %c0_25] : memref<768x512xbf16, #tpu.memory_space<vmem>>, vector<768x512xbf16>
    %cst_26 = arith.constant dense<0.000000e+00> : vector<16x512xf32>
    %43 = tpu.matmul %41, %42, %cst_26 {dimension_numbers = #tpu.dot_dimension_numbers<[1], [0], [0], [1], [0, 0, 1, 1], [], []>} : vector<16x768xbf16>, vector<768x512xbf16>, vector<16x512xf32> -> vector<16x512xf32>
    %44 = arith.addf %15, %43 : vector<16x512xf32>
    %c0_27 = arith.constant 0 : index
    %c0_28 = arith.constant 0 : index
    %c0_29 = arith.constant 0 : index
    %45 = vector.load %arg9[%c0_27, %c0_28, %c0_29] : memref<1x16x512xf32, #tpu.memory_space<vmem>>, vector<1x16x512xf32>
    %46 = vector.shape_cast %45 : vector<1x16x512xf32> to vector<16x512xf32>
    %47 = vector.shape_cast %44 : vector<16x512xf32> to vector<1x16x512xf32>
    tpu.vector_store %arg9[%c0_27, %c0_28, %c0_29], %47 {strides = array<i32>} : memref<1x16x512xf32, #tpu.memory_space<vmem>>, vector<1x16x512xf32>,
    return
  }
  func.func @transform_0(%arg0: i32) -> (i32, i32, i32) {
    %c0_i32 = arith.constant 0 : i32
    %c0_i32_0 = arith.constant 0 : i32
    %c0_i32_1 = arith.constant 0 : i32
    return %arg0, %c0_i32, %c0_i32_0 : i32, i32, i32
  }
  func.func @transform_1(%arg0: i32) -> (i32, i32) {
    %c0_i32 = arith.constant 0 : i32
    %c0_i32_0 = arith.constant 0 : i32
    %c0_i32_1 = arith.constant 0 : i32
    return %c0_i32, %c0_i32_0 : i32, i32
  }
  func.func @transform_2(%arg0: i32) -> (i32, i32) {
    %c0_i32 = arith.constant 0 : i32
    %c0_i32_0 = arith.constant 0 : i32
    %c0_i32_1 = arith.constant 0 : i32
    return %c0_i32, %c0_i32_0 : i32, i32
  }
  func.func @transform_3(%arg0: i32) -> (i32, i32) {
    %c0_i32 = arith.constant 0 : i32
    %c0_i32_0 = arith.constant 0 : i32
    %c0_i32_1 = arith.constant 0 : i32
    return %c0_i32, %c0_i32_0 : i32, i32
  }
  func.func @transform_4(%arg0: i32) -> (i32, i32) {
    %c0_i32 = arith.constant 0 : i32
    %c0_i32_0 = arith.constant 0 : i32
    %c0_i32_1 = arith.constant 0 : i32
    return %c0_i32, %c0_i32_0 : i32, i32
  }
  func.func @transform_5(%arg0: i32) -> (i32, i32) {
    %c0_i32 = arith.constant 0 : i32
    %c0_i32_0 = arith.constant 0 : i32
    %c0_i32_1 = arith.constant 0 : i32
    return %c0_i32, %c0_i32_0 : i32, i32
  }
  func.func @transform_6(%arg0: i32) -> (i32, i32) {
    %c0_i32 = arith.constant 0 : i32
    %c0_i32_0 = arith.constant 0 : i32
    %c0_i32_1 = arith.constant 0 : i32
    return %c0_i32, %c0_i32_0 : i32, i32
  }
  func.func @transform_7(%arg0: i32) -> (i32, i32) {
    %c0_i32 = arith.constant 0 : i32
    %c0_i32_0 = arith.constant 0 : i32
    %c0_i32_1 = arith.constant 0 : i32
    return %c0_i32, %c0_i32_0 : i32, i32
  }
  func.func @transform_8(%arg0: i32) -> (i32, i32, i32) {
    %c0_i32 = arith.constant 0 : i32
    %c0_i32_0 = arith.constant 0 : i32
    %c0_i32_1 = arith.constant 0 : i32
    return %arg0, %c0_i32, %c0_i32_0 : i32, i32, i32
  }
  func.func @transform_9(%arg0: i32) -> (i32, i32, i32) {
    %c0_i32 = arith.constant 0 : i32
    %c0_i32_0 = arith.constant 0 : i32
    %c0_i32_1 = arith.constant 0 : i32
    return %arg0, %c0_i32, %c0_i32_0 : i32, i32, i32
  }
}

</mosaic_0001>

<llo_original>
// kernel: tpu_custom_call.1
$region0: #{tpu_custom_call.1}
  #allocation0 [shape = 'u32[]', space=smem, size = 0x4, offset = 0x4, fixed_abs, tag = 'smem constant byte address 0x4 - core index']
  #allocation1 [shape = 'u32[144,128]{1,0:T(1,128)}', space=vmem, size = 0x12000, scoped, tag = 'internal scratch']
  %s0 = inlined_call_operand.hbm [shape: f32[2,16,128], index: 0, kind: input, shape index: {}]
  %s1 = inlined_call_operand.vmem [shape: f32[1,128], index: 1, kind: input, shape index: {}]
  %s2 = inlined_call_operand.hbm [shape: f32[1,128], index: 2, kind: input, shape index: {}]
  %s3 = inlined_call_operand.hbm [shape: bf16[128,512], index: 3, kind: input, shape index: {}]
  %s4 = inlined_call_operand.hbm [shape: bf16[384,256], index: 4, kind: input, shape index: {}]
  %s5 = inlined_call_operand.vmem [shape: f32[1,256], index: 5, kind: input, shape index: {}]
  %s6 = inlined_call_operand.vmem [shape: f32[1,256], index: 6, kind: input, shape index: {}]
  %s7 = inlined_call_operand.hbm [shape: bf16[768,512], index: 7, kind: input, shape index: {}]
  %s8 = inlined_call_operand.hbm [shape: f32[2,16,512], index: 8, kind: output, shape index: {0}]
  %s9 = inlined_call_operand.hbm [shape: f32[2,16,128], index: 9, kind: output, shape index: {1}]
  %10 = xla_tuple %s8, %s9
  %s11 = sld [smem:[#allocation0]]
  $region93: #{tpu_custom_call.1} parent=0
    _
  %s13 = ssub.s32 1, %s11
  %s14 = scalar_select 0, %s13, %s11
  $region1: #{tpu_custom_call.1} parent=0
    #allocation2 [shape = 'u8[16384]{0}', space=vmem, size = 0x4000, scoped, tag = 'input window, operand 0']
    #allocation3 [shape = 's32[2]{0}', space=sflag, size = 0x8, scoped, tag = 'scoped memory for tpu_custom_call.1']
    #allocation4 [shape = 's32[2]{0}', space=sflag, size = 0x8, scoped, tag = 'scoped memory for tpu_custom_call.1']
    #allocation5 [shape = 'u8[512]{0}', space=vmem, size = 0x400, scoped, tag = 'input window, operand 2, single buffered']
    #allocation6 [shape = 's32[1]{0}', space=sflag, size = 0x4, scoped, tag = 'scoped memory for tpu_custom_call.1']
    #allocation7 [shape = 'u8[131072]{0}', space=vmem, size = 0x20000, scoped, tag = 'input window, operand 3, single buffered']
    #allocation8 [shape = 'u8[196608]{0}', space=vmem, size = 0x30000, scoped, tag = 'input window, operand 4, single buffered']
    #allocation9 [shape = 's32[1]{0}', space=sflag, size = 0x4, scoped, tag = 'scoped memory for tpu_custom_call.1']
    #allocation10 [shape = 'u8[786432]{0}', space=vmem, size = 0xc0000, scoped, tag = 'input window, operand 7, single buffered']
    #allocation11 [shape = 'u8[65536]{0}', space=vmem, size = 0x10000, scoped, tag = 'output window, operand 0']
    #allocation12 [shape = 'u8[16384]{0}', space=vmem, size = 0x4000, scoped, tag = 'output window, operand 1']
    #allocation13 [shape = 's32[2]{0}', space=sflag, size = 0x8, scoped, tag = 'scoped memory for tpu_custom_call.1']
    %15 = vsyncpa [#allocation3], 0
    %s16 = scalar_lea.sflag [#allocation3], 1
    %17 = vsyncpa %s16, 0
    %18 = vsyncpa [#allocation6], 0
    %19 = vsyncpa [#allocation9], 0
    %20 = vsyncpa [#allocation4], 0
    %s21 = scalar_lea.sflag [#allocation4], 1
    %22 = vsyncpa %s21, 0
    %23 = vsyncpa [#allocation13], 0
    %s24 = scalar_lea.sflag [#allocation13], 1
    %25 = vsyncpa %s24, 0
    loop: start=0, step=1, limit=4
    $region2: #{tpu_custom_call.1} parent=1 // loop_pre_header
      _
    $region3: #{tpu_custom_call.1} parent=1 // loop_header
      %s27 = sphi 0, %s31
      %p28 = scmp.ge.s32.totalorder %s27, 4
      %s37 = sphi 0, %s39
      %s40 = sphi 0, %s37
      %s41 = sphi 0, %s40
      %s57 = sphi 0, %s41
      %s61 = sphi 0, %s61
      %s63 = sphi 0, %s61
      %s64 = sphi 0, %s63
      %s78 = sphi 0, %s64
      %s82 = sphi 0, %s82
      %s84 = sphi 0, %s82
      %s85 = sphi 0, %s84
      %s99 = sphi 0, %s85
      %s103 = sphi 0, %s103
      %s105 = sphi 0, %s103
      %s106 = sphi 0, %s105
      %s120 = sphi 0, %s106
      %s124 = sphi 0, %s124
      %s126 = sphi 0, %s124
      %s127 = sphi 0, %s126
      %s141 = sphi 0, %s127
      %s145 = sphi 0, %s145
      %s147 = sphi 0, %s145
      %s148 = sphi 0, %s147
      %s162 = sphi 0, %s148
      %s166 = sphi 0, %s166
      %s168 = sphi 0, %s166
      %s169 = sphi 0, %s168
      %s183 = sphi 0, %s169
      %s187 = sphi 0, %s187
      %s189 = sphi 0, %s187
      %s190 = sphi 0, %s189
      %s204 = sphi 0, %s190
      %s210 = sphi 0, %s212
      %s213 = sphi 0, %s210
      %s214 = sphi 0, %s213
      %s230 = sphi 0, %s214
      %s236 = sphi 0, %s238
      %s239 = sphi 0, %s236
      %s240 = sphi 0, %s239
      %s256 = sphi 0, %s240
    $region4: #{tpu_custom_call.1} parent=1 // loop_header_branch
      %30 = sbr.rel (%p28) target = $region8
    $region5: #{tpu_custom_call.1} parent=1 // loop_body
      %s32 = ssub.s32 %s27, 1
      %s33 = ssub.s32 %s27, 2
      %s34 = sadd.s32 %s27, 1
      %s35 = ssub.s32 %s27, %s34
      %p36 = scmp.eq.s32.totalorder %s35, 0
      %s38 = sadd.s32 %s37, 1
      %s39 = scalar_select %p36, %s37, %s38
      %p42 = pneg %p36
      %p43 = scmp.eq.s32.totalorder %s27, 1
      %p44 = por %p42, %p43
      %p45 = scmp.ne.s32.totalorder %s37, %s40
      %p46 = scmp.eq.s32.totalorder %s27, 0
      %p47 = por %p45, %p46
      %p48 = scmp.ne.s32.totalorder %s37, %s40
      %p49 = scmp.eq.s32.totalorder %s32, 1
      %p50 = por %p48, %p49
      %p51 = scmp.ne.s32.totalorder %s40, %s41
      %p52 = scmp.eq.s32.totalorder %s32, 0
      %p53 = por %p51, %p52
      %p54 = scmp.ne.s32.totalorder %s40, %s41
      %p55 = scmp.eq.s32.totalorder %s33, 1
      %p56 = por %p54, %p55
      %p58 = scmp.ne.s32.totalorder %s41, %s57
      %p59 = scmp.eq.s32.totalorder %s33, 0
      %p60 = por %p58, %p59
      %s62 = sadd.s32 %s61, 1
      %p65 = scmp.eq.s32.totalorder %s27, 1
      %p66 = scmp.ne.s32.totalorder %s61, %s63
      %p67 = scmp.eq.s32.totalorder %s27, 0
      %p68 = por %p66, %p67
      %p69 = scmp.ne.s32.totalorder %s61, %s63
      %p70 = scmp.eq.s32.totalorder %s32, 1
      %p71 = por %p69, %p70
      %p72 = scmp.ne.s32.totalorder %s63, %s64
      %p73 = scmp.eq.s32.totalorder %s32, 0
      %p74 = por %p72, %p73
      %p75 = scmp.ne.s32.totalorder %s63, %s64
      %p76 = scmp.eq.s32.totalorder %s33, 1
      %p77 = por %p75, %p76
      %p79 = scmp.ne.s32.totalorder %s64, %s78
      %p80 = scmp.eq.s32.totalorder %s33, 0
      %p81 = por %p79, %p80
      %s83 = sadd.s32 %s82, 1
      %p86 = scmp.eq.s32.totalorder %s27, 1
      %p87 = scmp.ne.s32.totalorder %s82, %s84
      %p88 = scmp.eq.s32.totalorder %s27, 0
      %p89 = por %p87, %p88
      %p90 = scmp.ne.s32.totalorder %s82, %s84
      %p91 = scmp.eq.s32.totalorder %s32, 1
      %p92 = por %p90, %p91
      %p93 = scmp.ne.s32.totalorder %s84, %s85
      %p94 = scmp.eq.s32.totalorder %s32, 0
      %p95 = por %p93, %p94
      %p96 = scmp.ne.s32.totalorder %s84, %s85
      %p97 = scmp.eq.s32.totalorder %s33, 1
      %p98 = por %p96, %p97
      %p100 = scmp.ne.s32.totalorder %s85, %s99
      %p101 = scmp.eq.s32.totalorder %s33, 0
      %p102 = por %p100, %p101
      %s104 = sadd.s32 %s103, 1
      %p107 = scmp.eq.s32.totalorder %s27, 1
      %p108 = scmp.ne.s32.totalorder %s103, %s105
      %p109 = scmp.eq.s32.totalorder %s27, 0
      %p110 = por %p108, %p109
      %p111 = scmp.ne.s32.totalorder %s103, %s105
      %p112 = scmp.eq.s32.totalorder %s32, 1
      %p113 = por %p111, %p112
      %p114 = scmp.ne.s32.totalorder %s105, %s106
      %p115 = scmp.eq.s32.totalorder %s32, 0
      %p116 = por %p114, %p115
      %p117 = scmp.ne.s32.totalorder %s105, %s106
      %p118 = scmp.eq.s32.totalorder %s33, 1
      %p119 = por %p117, %p118
      %p121 = scmp.ne.s32.totalorder %s106, %s120
      %p122 = scmp.eq.s32.totalorder %s33, 0
      %p123 = por %p121, %p122
      %s125 = sadd.s32 %s124, 1
      %p128 = scmp.eq.s32.totalorder %s27, 1
      %p129 = scmp.ne.s32.totalorder %s124, %s126
      %p130 = scmp.eq.s32.totalorder %s27, 0
      %p131 = por %p129, %p130
      %p132 = scmp.ne.s32.totalorder %s124, %s126
      %p133 = scmp.eq.s32.totalorder %s32, 1
      %p134 = por %p132, %p133
      %p135 = scmp.ne.s32.totalorder %s126, %s127
      %p136 = scmp.eq.s32.totalorder %s32, 0
      %p137 = por %p135, %p136
      %p138 = scmp.ne.s32.totalorder %s126, %s127
      %p139 = scmp.eq.s32.totalorder %s33, 1
      %p140 = por %p138, %p139
      %p142 = scmp.ne.s32.totalorder %s127, %s141
      %p143 = scmp.eq.s32.totalorder %s33, 0
      %p144 = por %p142, %p143
      %s146 = sadd.s32 %s145, 1
      %p149 = scmp.eq.s32.totalorder %s27, 1
      %p150 = scmp.ne.s32.totalorder %s145, %s147
      %p151 = scmp.eq.s32.totalorder %s27, 0
      %p152 = por %p150, %p151
      %p153 = scmp.ne.s32.totalorder %s145, %s147
      %p154 = scmp.eq.s32.totalorder %s32, 1
      %p155 = por %p153, %p154
      %p156 = scmp.ne.s32.totalorder %s147, %s148
      %p157 = scmp.eq.s32.totalorder %s32, 0
      %p158 = por %p156, %p157
      %p159 = scmp.ne.s32.totalorder %s147, %s148
      %p160 = scmp.eq.s32.totalorder %s33, 1
      %p161 = por %p159, %p160
      %p163 = scmp.ne.s32.totalorder %s148, %s162
      %p164 = scmp.eq.s32.totalorder %s33, 0
      %p165 = por %p163, %p164
      %s167 = sadd.s32 %s166, 1
      %p170 = scmp.eq.s32.totalorder %s27, 1
      %p171 = scmp.ne.s32.totalorder %s166, %s168
      %p172 = scmp.eq.s32.totalorder %s27, 0
      %p173 = por %p171, %p172
      %p174 = scmp.ne.s32.totalorder %s166, %s168
      %p175 = scmp.eq.s32.totalorder %s32, 1
      %p176 = por %p174, %p175
      %p177 = scmp.ne.s32.totalorder %s168, %s169
      %p178 = scmp.eq.s32.totalorder %s32, 0
      %p179 = por %p177, %p178
      %p180 = scmp.ne.s32.totalorder %s168, %s169
      %p181 = scmp.eq.s32.totalorder %s33, 1
      %p182 = por %p180, %p181
      %p184 = scmp.ne.s32.totalorder %s169, %s183
      %p185 = scmp.eq.s32.totalorder %s33, 0
      %p186 = por %p184, %p185
      %s188 = sadd.s32 %s187, 1
      %p191 = scmp.eq.s32.totalorder %s27, 1
      %p192 = scmp.ne.s32.totalorder %s187, %s189
      %p193 = scmp.eq.s32.totalorder %s27, 0
      %p194 = por %p192, %p193
      %p195 = scmp.ne.s32.totalorder %s187, %s189
      %p196 = scmp.eq.s32.totalorder %s32, 1
      %p197 = por %p195, %p196
      %p198 = scmp.ne.s32.totalorder %s189, %s190
      %p199 = scmp.eq.s32.totalorder %s32, 0
      %p200 = por %p198, %p199
      %p201 = scmp.ne.s32.totalorder %s189, %s190
      %p202 = scmp.eq.s32.totalorder %s33, 1
      %p203 = por %p201, %p202
      %p205 = scmp.ne.s32.totalorder %s190, %s204
      %p206 = scmp.eq.s32.totalorder %s33, 0
      %p207 = por %p205, %p206
      %s208 = ssub.s32 %s27, %s34
      %p209 = scmp.eq.s32.totalorder %s208, 0
      %s211 = sadd.s32 %s210, 1
      %s212 = scalar_select %p209, %s210, %s211
      %p215 = pneg %p209
      %p216 = scmp.eq.s32.totalorder %s27, 1
      %p217 = por %p215, %p216
      %p218 = scmp.ne.s32.totalorder %s210, %s213
      %p219 = scmp.eq.s32.totalorder %s27, 0
      %p220 = por %p218, %p219
      %p221 = scmp.ne.s32.totalorder %s210, %s213
      %p222 = scmp.eq.s32.totalorder %s32, 1
      %p223 = por %p221, %p222
      %p224 = scmp.ne.s32.totalorder %s213, %s214
      %p225 = scmp.eq.s32.totalorder %s32, 0
      %p226 = por %p224, %p225
      %p227 = scmp.ne.s32.totalorder %s213, %s214
      %p228 = scmp.eq.s32.totalorder %s33, 1
      %p229 = por %p227, %p228
      %p231 = scmp.ne.s32.totalorder %s214, %s230
      %p232 = scmp.eq.s32.totalorder %s33, 0
      %p233 = por %p231, %p232
      %s234 = ssub.s32 %s27, %s34
      %p235 = scmp.eq.s32.totalorder %s234, 0
      %s237 = sadd.s32 %s236, 1
      %s238 = scalar_select %p235, %s236, %s237
      %p241 = pneg %p235
      %p242 = scmp.eq.s32.totalorder %s27, 1
      %p243 = por %p241, %p242
      %p244 = scmp.ne.s32.totalorder %s236, %s239
      %p245 = scmp.eq.s32.totalorder %s27, 0
      %p246 = por %p244, %p245
      %p247 = scmp.ne.s32.totalorder %s236, %s239
      %p248 = scmp.eq.s32.totalorder %s32, 1
      %p249 = por %p247, %p248
      %p250 = scmp.ne.s32.totalorder %s239, %s240
      %p251 = scmp.eq.s32.totalorder %s32, 0
      %p252 = por %p250, %p251
      %p253 = scmp.ne.s32.totalorder %s239, %s240
      %p254 = scmp.eq.s32.totalorder %s33, 1
      %p255 = por %p253, %p254
      %p257 = scmp.ne.s32.totalorder %s240, %s256
      %p258 = scmp.eq.s32.totalorder %s33, 0
      %p259 = por %p257, %p258
      %p260 = scmp.le.s32.totalorder 1, %s27
      %p261 = scmp.lt.s32.totalorder %s27, 3
      %p262 = pnand %p260, %p261
      %p263 = pneg %p262
      // Predicated region
      $region9: #{tpu_custom_call.1} parent=5 // pred_check
        _
      $region10: #{tpu_custom_call.1} parent=5 // pred_check_branch
        %265 = sbr.rel (%p262) target = $region12
      $region11: #{tpu_custom_call.1} parent=5 // pred_region
        %s266 = ssub.s32 %s27, 1
        // Predicated region
        $region13: #{tpu_custom_call.1} parent=11 // pred_check
          %p267 = pneg %p74
        $region14: #{tpu_custom_call.1} parent=11 // pred_check_branch
          %269 = sbr.rel (%p267) target = $region16
        $region15: #{tpu_custom_call.1} parent=11 // pred_region
          _
        $region16: #{tpu_custom_call.1} parent=11 // pred_fallthru
          _
        // Predicated region
        $region17: #{tpu_custom_call.1} parent=11 // pred_check
          %p270 = pneg %p95
        $region18: #{tpu_custom_call.1} parent=11 // pred_check_branch
          %272 = sbr.rel (%p270) target = $region20
        $region19: #{tpu_custom_call.1} parent=11 // pred_region
          %s274 = ssub.s32 16, 16
          %275 = vsyncadd [#allocation6], %s274
          %s277 = sshll.u32 [#allocation5], 4
          %s278 = int_to_ptr.vmem [resolvable:$true] %s277
          %280 = dma.hbm_to_vmem [thread:$0]  %s2, 16, %s278, [#allocation6]
        $region20: #{tpu_custom_call.1} parent=11 // pred_fallthru
          _
        // Predicated region
        $region21: #{tpu_custom_call.1} parent=11 // pred_check
          %p281 = pneg %p116
        $region22: #{tpu_custom_call.1} parent=11 // pred_check_branch
          %283 = sbr.rel (%p281) target = $region24
        $region23: #{tpu_custom_call.1} parent=11 // pred_region
          %s285 = ssub.s32 4096, 4096
          %286 = vsyncadd [#allocation6], %s285
          %s287 = sshll.u32 [#allocation7], 4
          %s288 = int_to_ptr.vmem [resolvable:$true] %s287
          %293 = dma.hbm_to_vmem [thread:$0]  %s3, 4096, %s288, [#allocation6], 256, 256, 16
        $region24: #{tpu_custom_call.1} parent=11 // pred_fallthru
          _
        // Predicated region
        $region25: #{tpu_custom_call.1} parent=11 // pred_check
          %p294 = pneg %p137
        $region26: #{tpu_custom_call.1} parent=11 // pred_check_branch
          %296 = sbr.rel (%p294) target = $region28
        $region27: #{tpu_custom_call.1} parent=11 // pred_region
          %s298 = ssub.s32 6144, 6144
          %299 = vsyncadd [#allocation9], %s298
          %s300 = sshll.u32 [#allocation8], 4
          %s301 = int_to_ptr.vmem [resolvable:$true] %s300
          %306 = dma.hbm_to_vmem [thread:$0]  %s4, 6144, %s301, [#allocation9], 128, 128, 8
        $region28: #{tpu_custom_call.1} parent=11 // pred_fallthru
          _
        // Predicated region
        $region29: #{tpu_custom_call.1} parent=11 // pred_check
          %p307 = pneg %p158
        $region30: #{tpu_custom_call.1} parent=11 // pred_check_branch
          %309 = sbr.rel (%p307) target = $region32
        $region31: #{tpu_custom_call.1} parent=11 // pred_region
          _
        $region32: #{tpu_custom_call.1} parent=11 // pred_fallthru
          _
        // Predicated region
        $region33: #{tpu_custom_call.1} parent=11 // pred_check
          %p310 = pneg %p179
        $region34: #{tpu_custom_call.1} parent=11 // pred_check_branch
          %312 = sbr.rel (%p310) target = $region36
        $region35: #{tpu_custom_call.1} parent=11 // pred_region
          _
        $region36: #{tpu_custom_call.1} parent=11 // pred_fallthru
          _
        // Predicated region
        $region37: #{tpu_custom_call.1} parent=11 // pred_check
          %p313 = pneg %p200
        $region38: #{tpu_custom_call.1} parent=11 // pred_check_branch
          %315 = sbr.rel (%p313) target = $region40
        $region39: #{tpu_custom_call.1} parent=11 // pred_region
          %s317 = ssub.s32 24576, 24576
          %318 = vsyncadd [#allocation9], %s317
          %s319 = sshll.u32 [#allocation10], 4
          %s320 = int_to_ptr.vmem [resolvable:$true] %s319
          %325 = dma.hbm_to_vmem [thread:$0]  %s7, 24576, %s320, [#allocation9], 256, 256, 16
        $region40: #{tpu_custom_call.1} parent=11 // pred_fallthru
          _
      $region12: #{tpu_custom_call.1} parent=5 // pred_fallthru
        _
      %p326 = scmp.lt.s32.totalorder %s27, 2
      // Predicated region
      $region41: #{tpu_custom_call.1} parent=5 // pred_check
        %p327 = pneg %p326
      $region42: #{tpu_custom_call.1} parent=5 // pred_check_branch
        %329 = sbr.rel (%p327) target = $region44
      $region43: #{tpu_custom_call.1} parent=5 // pred_region
        // Predicated region
        $region45: #{tpu_custom_call.1} parent=43 // pred_check
          %p330 = pneg %p47
        $region46: #{tpu_custom_call.1} parent=43 // pred_check_branch
          %332 = sbr.rel (%p330) target = $region48
        $region47: #{tpu_custom_call.1} parent=43 // pred_region
          %s333 = sand.u32 %s37, 1
          %s334 = scalar_lea.sflag [#allocation3], %s333
          %s335 = sand.u32 %s37, 1
          %s336 = smul.addr %s335, 16
          %s337 = scalar_lea.vmem [#allocation2], %s336
          %s339 = ssub.s32 256, 256
          %340 = vsyncadd %s334, %s339
          %s341 = smul.addr %s27, 2
          %s342 = smul.addr %s341, 128
          %s343 = scalar_lea.hbm %s0, %s342
          %s344 = sshll.u32 %s337, 4
          %s345 = int_to_ptr.vmem [resolvable:$true] %s344
          %350 = dma.hbm_to_vmem [thread:$0]  %s343, 256, %s345, %s334, 128, 128, 8
        $region48: #{tpu_custom_call.1} parent=43 // pred_fallthru
          _
      $region44: #{tpu_custom_call.1} parent=5 // pred_fallthru
        _
      %p351 = scmp.le.s32.totalorder 1, %s27
      %p352 = scmp.lt.s32.totalorder %s27, 3
      %p353 = pnand %p351, %p352
      %p354 = pneg %p353
      // Predicated region
      $region49: #{tpu_custom_call.1} parent=5 // pred_check
        _
      $region50: #{tpu_custom_call.1} parent=5 // pred_check_branch
        %356 = sbr.rel (%p353) target = $region52
      $region51: #{tpu_custom_call.1} parent=5 // pred_region
        %s357 = ssub.s32 %s27, 1
        %s358 = sand.u32 %s40, 1
        %s359 = scalar_lea.sflag [#allocation3], %s358
        %s360 = sand.u32 %s40, 1
        %s361 = smul.addr %s360, 16
        %s362 = scalar_lea.vmem [#allocation2], %s361
        // Predicated region
        $region53: #{tpu_custom_call.1} parent=51 // pred_check
          %p363 = pneg %p53
        $region54: #{tpu_custom_call.1} parent=51 // pred_check_branch
          %365 = sbr.rel (%p363) target = $region56
        $region55: #{tpu_custom_call.1} parent=51 // pred_region
          %366 = dma.done %s359, 256
        $region56: #{tpu_custom_call.1} parent=51 // pred_fallthru
          _
        // Predicated region
        $region57: #{tpu_custom_call.1} parent=51 // pred_check
          %p367 = pneg %p95
        $region58: #{tpu_custom_call.1} parent=51 // pred_check_branch
          %369 = sbr.rel (%p367) target = $region60
        $region59: #{tpu_custom_call.1} parent=51 // pred_region
          %370 = dma.done [#allocation6], 16
        $region60: #{tpu_custom_call.1} parent=51 // pred_fallthru
          _
        // Predicated region
        $region61: #{tpu_custom_call.1} parent=51 // pred_check
          %p371 = pneg %p116
        $region62: #{tpu_custom_call.1} parent=51 // pred_check_branch
          %373 = sbr.rel (%p371) target = $region64
        $region63: #{tpu_custom_call.1} parent=51 // pred_region
          %374 = dma.done [#allocation6], 4096
        $region64: #{tpu_custom_call.1} parent=51 // pred_fallthru
          _
        // Predicated region
        $region65: #{tpu_custom_call.1} parent=51 // pred_check
          %p375 = pneg %p137
        $region66: #{tpu_custom_call.1} parent=51 // pred_check_branch
          %377 = sbr.rel (%p375) target = $region68
        $region67: #{tpu_custom_call.1} parent=51 // pred_region
          %378 = dma.done [#allocation9], 6144
        $region68: #{tpu_custom_call.1} parent=51 // pred_fallthru
          _
        // Predicated region
        $region69: #{tpu_custom_call.1} parent=51 // pred_check
          %p379 = pneg %p200
        $region70: #{tpu_custom_call.1} parent=51 // pred_check_branch
          %381 = sbr.rel (%p379) target = $region72
        $region71: #{tpu_custom_call.1} parent=51 // pred_region
          %382 = dma.done [#allocation9], 24576
        $region72: #{tpu_custom_call.1} parent=51 // pred_fallthru
          _
        %s383 = sand.u32 %s40, 1
        %s384 = scalar_lea.sflag [#allocation3], %s383
        %s385 = sand.u32 %s40, 1
        %s386 = smul.addr %s385, 16
        %s387 = scalar_lea.vmem [#allocation2], %s386
        %p388 = pneg %p53
        %p389 = pneg %p50
        %p390 = pneg %p74
        %p391 = pneg %p71
        %p392 = pneg %p95
        %p393 = pneg %p92
        %p394 = pneg %p116
        %p395 = pneg %p113
        %p396 = pneg %p137
        %p397 = pneg %p134
        %p398 = pneg %p158
        %p399 = pneg %p155
        %p400 = pneg %p179
        %p401 = pneg %p176
        %p402 = pneg %p200
        %p403 = pneg %p197
        %p404 = pneg %p226
        %p405 = pneg %p223
        %s406 = sand.u32 %s213, 1
        %s407 = scalar_lea.sflag [#allocation4], %s406
        %s408 = sand.u32 %s213, 1
        %s409 = smul.addr %s408, 64
        %s410 = scalar_lea.vmem [#allocation11], %s409
        %p411 = pneg %p252
        %p412 = pneg %p249
        %s413 = sand.u32 %s239, 1
        %s414 = scalar_lea.sflag [#allocation13], %s413
        %s415 = sand.u32 %s239, 1
        %s416 = smul.addr %s415, 16
        %s417 = scalar_lea.vmem [#allocation12], %s416
        %v419 = vld [vmem:[%s362] sm:$0xff]
        %v420 = vld [vmem:[%s362 + $0x8] sm:$0xff]
        %v421 = vld [vmem:[%s1] sm:$0x1]
        %v423 = vlaneseq
        %v424 = vshrl.u32 %v423, 7
        %v425 = vsub.s32 0, %v424
        %v426 = vrot.slane %v421, %v425
        %v428 = vmul.f32 %v419, %v426
        %v429 = vmul.f32 %v420, %v426
        %v430 = vld [vmem:[#allocation5] sm:$0x1]
        %v432 = vlaneseq
        %v433 = vshrl.u32 %v432, 7
        %v434 = vsub.s32 0, %v433
        %v435 = vrot.slane %v430, %v434
        %v437 = vadd.f32 %v428, %v435
        %v438 = vadd.f32 %v429, %v435
        %v439 = vmax.f32 %v437, 0.0
        %v440 = vmax.f32 %v438, 0.0
        %441 = vst [vmem:[%s417] sm:$0xff] %v439
        %442 = vst [vmem:[%s417 + $0x8] sm:$0xff] %v440
        %v443 = vpack.c.bf16 %v440, %v439
        %v444 = vld [vmem:[#allocation7] sm:$0xff]
        %v445 = vld [vmem:[#allocation7 + $0x8] sm:$0xff]
        %v446 = vld [vmem:[#allocation7 + $0x10] sm:$0xff]
        %v447 = vld [vmem:[#allocation7 + $0x18] sm:$0xff]
        %v448 = vld [vmem:[#allocation7 + $0x20] sm:$0xff]
        %v449 = vld [vmem:[#allocation7 + $0x28] sm:$0xff]
        %v450 = vld [vmem:[#allocation7 + $0x30] sm:$0xff]
        %v451 = vld [vmem:[#allocation7 + $0x38] sm:$0xff]
        %v452 = vld [vmem:[#allocation7 + $0x40] sm:$0xff]
        %v453 = vld [vmem:[#allocation7 + $0x48] sm:$0xff]
        %v454 = vld [vmem:[#allocation7 + $0x50] sm:$0xff]
        %v455 = vld [vmem:[#allocation7 + $0x58] sm:$0xff]
        %v456 = vld [vmem:[#allocation7 + $0x60] sm:$0xff]
        %v457 = vld [vmem:[#allocation7 + $0x68] sm:$0xff]
        %v458 = vld [vmem:[#allocation7 + $0x70] sm:$0xff]
        %v459 = vld [vmem:[#allocation7 + $0x78] sm:$0xff]
        %v460 = vld [vmem:[#allocation7 + $0x80] sm:$0xff]
        %v461 = vld [vmem:[#allocation7 + $0x88] sm:$0xff]
        %v462 = vld [vmem:[#allocation7 + $0x90] sm:$0xff]
        %v463 = vld [vmem:[#allocation7 + $0x98] sm:$0xff]
        %v464 = vld [vmem:[#allocation7 + $0xa0] sm:$0xff]
        %v465 = vld [vmem:[#allocation7 + $0xa8] sm:$0xff]
        %v466 = vld [vmem:[#allocation7 + $0xb0] sm:$0xff]
        %v467 = vld [vmem:[#allocation7 + $0xb8] sm:$0xff]
        %v468 = vld [vmem:[#allocation7 + $0xc0] sm:$0xff]
        %v469 = vld [vmem:[#allocation7 + $0xc8] sm:$0xff]
        %v470 = vld [vmem:[#allocation7 + $0xd0] sm:$0xff]
        %v471 = vld [vmem:[#allocation7 + $0xd8] sm:$0xff]
        %v472 = vld [vmem:[#allocation7 + $0xe0] sm:$0xff]
        %v473 = vld [vmem:[#allocation7 + $0xe8] sm:$0xff]
        %v474 = vld [vmem:[#allocation7 + $0xf0] sm:$0xff]
        %v475 = vld [vmem:[#allocation7 + $0xf8] sm:$0xff]
        %vm478 = vcmask 1040384
        %v479 = vrot.slane %v439, 7
        %v480 = vrot.slane %v440, 7
        %v481 = vsel %vm478, %v479, %v480
        %v484 = vsel %vm478, 0.0, %v479
        %vm485 = vcmask 1046528
        %v486 = vrot.slane %v439, 1
        %v487 = vrot.slane %v440, 1
        %v488 = vsel %vm485, %v486, %v487
        %v491 = vsel %vm485, %v487, 0.0
        %v492 = vpack.c.bf16 %v481, %v484
        %v493 = vpack.c.bf16 %v491, %v488
        %v494 = vld [vmem:[#allocation8] sm:$0xff]
        %v495 = vld [vmem:[#allocation8 + $0x8] sm:$0xff]
        %v496 = vld [vmem:[#allocation8 + $0x10] sm:$0xff]
        %v497 = vld [vmem:[#allocation8 + $0x18] sm:$0xff]
        %v498 = vld [vmem:[#allocation8 + $0x20] sm:$0xff]
        %v499 = vld [vmem:[#allocation8 + $0x28] sm:$0xff]
        %v500 = vld [vmem:[#allocation8 + $0x30] sm:$0xff]
        %v501 = vld [vmem:[#allocation8 + $0x38] sm:$0xff]
        %v502 = vld [vmem:[#allocation8 + $0x40] sm:$0xff]
        %v503 = vld [vmem:[#allocation8 + $0x48] sm:$0xff]
        %v504 = vld [vmem:[#allocation8 + $0x50] sm:$0xff]
        %v505 = vld [vmem:[#allocation8 + $0x58] sm:$0xff]
        %v506 = vld [vmem:[#allocation8 + $0x60] sm:$0xff]
        %v507 = vld [vmem:[#allocation8 + $0x68] sm:$0xff]
        %v508 = vld [vmem:[#allocation8 + $0x70] sm:$0xff]
        %v509 = vld [vmem:[#allocation8 + $0x78] sm:$0xff]
        %v510 = vld [vmem:[#allocation8 + $0x80] sm:$0xff]
        %v511 = vld [vmem:[#allocation8 + $0x88] sm:$0xff]
        %v512 = vld [vmem:[#allocation8 + $0x90] sm:$0xff]
        %v513 = vld [vmem:[#allocation8 + $0x98] sm:$0xff]
        %v514 = vld [vmem:[#allocation8 + $0xa0] sm:$0xff]
        %v515 = vld [vmem:[#allocation8 + $0xa8] sm:$0xff]
        %v516 = vld [vmem:[#allocation8 + $0xb0] sm:$0xff]
        %v517 = vld [vmem:[#allocation8 + $0xb8] sm:$0xff]
        %v518 = vld [vmem:[#allocation8 + $0xc0] sm:$0xff]
        %v519 = vld [vmem:[#allocation8 + $0xc8] sm:$0xff]
        %v520 = vld [vmem:[#allocation8 + $0xd0] sm:$0xff]
        %v521 = vld [vmem:[#allocation8 + $0xd8] sm:$0xff]
        %v522 = vld [vmem:[#allocation8 + $0xe0] sm:$0xff]
        %v523 = vld [vmem:[#allocation8 + $0xe8] sm:$0xff]
        %v524 = vld [vmem:[#allocation8 + $0xf0] sm:$0xff]
        %v525 = vld [vmem:[#allocation8 + $0xf8] sm:$0xff]
        %v526 = vld [vmem:[#allocation8 + $0x100] sm:$0xff]
        %v527 = vld [vmem:[#allocation8 + $0x108] sm:$0xff]
        %v528 = vld [vmem:[#allocation8 + $0x110] sm:$0xff]
        %v529 = vld [vmem:[#allocation8 + $0x118] sm:$0xff]
        %v530 = vld [vmem:[#allocation8 + $0x120] sm:$0xff]
        %v531 = vld [vmem:[#allocation8 + $0x128] sm:$0xff]
        %v532 = vld [vmem:[#allocation8 + $0x130] sm:$0xff]
        %v533 = vld [vmem:[#allocation8 + $0x138] sm:$0xff]
        %v534 = vld [vmem:[#allocation8 + $0x140] sm:$0xff]
        %v535 = vld [vmem:[#allocation8 + $0x148] sm:$0xff]
        %v536 = vld [vmem:[#allocation8 + $0x150] sm:$0xff]
        %v537 = vld [vmem:[#allocation8 + $0x158] sm:$0xff]
        %v538 = vld [vmem:[#allocation8 + $0x160] sm:$0xff]
        %v539 = vld [vmem:[#allocation8 + $0x168] sm:$0xff]
        %v540 = vld [vmem:[#allocation8 + $0x170] sm:$0xff]
        %v541 = vld [vmem:[#allocation8 + $0x178] sm:$0xff]
        %v590 = vunpack.c.l.b16 %v494
        %v591 = vunpack.c.h.b16 %v494
        %v592 = vunpack.c.l.b16 %v495
        %v593 = vunpack.c.h.b16 %v495
        %v594 = vunpack.c.l.b16 %v496
        %v595 = vunpack.c.h.b16 %v496
        %v596 = vunpack.c.l.b16 %v497
        %v597 = vunpack.c.h.b16 %v497
        %v598 = vunpack.c.l.b16 %v498
        %v599 = vunpack.c.h.b16 %v498
        %v600 = vunpack.c.l.b16 %v499
        %v601 = vunpack.c.h.b16 %v499
        %v602 = vunpack.c.l.b16 %v500
        %v603 = vunpack.c.h.b16 %v500
        %v604 = vunpack.c.l.b16 %v501
        %v605 = vunpack.c.h.b16 %v501
        %v606 = vunpack.c.l.b16 %v502
        %v607 = vunpack.c.h.b16 %v502
        %v608 = vunpack.c.l.b16 %v503
        %v609 = vunpack.c.h.b16 %v503
        %v610 = vunpack.c.l.b16 %v504
        %v611 = vunpack.c.h.b16 %v504
        %v612 = vunpack.c.l.b16 %v505
        %v613 = vunpack.c.h.b16 %v505
        %v614 = vunpack.c.l.b16 %v506
        %v615 = vunpack.c.h.b16 %v506
        %v616 = vunpack.c.l.b16 %v507
        %v617 = vunpack.c.h.b16 %v507
        %v618 = vunpack.c.l.b16 %v508
        %v619 = vunpack.c.h.b16 %v508
        %v620 = vunpack.c.l.b16 %v509
        %v621 = vunpack.c.h.b16 %v509
        %v622 = vunpack.c.l.b16 %v510
        %v623 = vunpack.c.h.b16 %v510
        %v624 = vunpack.c.l.b16 %v511
        %v625 = vunpack.c.h.b16 %v511
        %v626 = vunpack.c.l.b16 %v512
        %v627 = vunpack.c.h.b16 %v512
        %v628 = vunpack.c.l.b16 %v513
        %v629 = vunpack.c.h.b16 %v513
        %v630 = vunpack.c.l.b16 %v514
        %v631 = vunpack.c.h.b16 %v514
        %v632 = vunpack.c.l.b16 %v515
        %v633 = vunpack.c.h.b16 %v515
        %v634 = vunpack.c.l.b16 %v516
        %v635 = vunpack.c.h.b16 %v516
        %v636 = vunpack.c.l.b16 %v517
        %v637 = vunpack.c.h.b16 %v517
        %v638 = vunpack.c.l.b16 %v518
        %v639 = vunpack.c.h.b16 %v518
        %v640 = vunpack.c.l.b16 %v519
        %v641 = vunpack.c.h.b16 %v519
        %v642 = vunpack.c.l.b16 %v520
        %v643 = vunpack.c.h.b16 %v520
        %v644 = vunpack.c.l.b16 %v521
        %v645 = vunpack.c.h.b16 %v521
        %v646 = vunpack.c.l.b16 %v522
        %v647 = vunpack.c.h.b16 %v522
        %v648 = vunpack.c.l.b16 %v523
        %v649 = vunpack.c.h.b16 %v523
        %v650 = vunpack.c.l.b16 %v524
        %v651 = vunpack.c.h.b16 %v524
        %v652 = vunpack.c.l.b16 %v525
        %v653 = vunpack.c.h.b16 %v525
        %v654 = vunpack.c.l.b16 %v526
        %v655 = vunpack.c.h.b16 %v526
        %v656 = vunpack.c.l.b16 %v527
        %v657 = vunpack.c.h.b16 %v527
        %v658 = vunpack.c.l.b16 %v528
        %v659 = vunpack.c.h.b16 %v528
        %v660 = vunpack.c.l.b16 %v529
        %v661 = vunpack.c.h.b16 %v529
        %v662 = vunpack.c.l.b16 %v530
        %v663 = vunpack.c.h.b16 %v530
        %v664 = vunpack.c.l.b16 %v531
        %v665 = vunpack.c.h.b16 %v531
        %v666 = vunpack.c.l.b16 %v532
        %v667 = vunpack.c.h.b16 %v532
        %v668 = vunpack.c.l.b16 %v533
        %v669 = vunpack.c.h.b16 %v533
        %v670 = vunpack.c.l.b16 %v534
        %v671 = vunpack.c.h.b16 %v534
        %v672 = vunpack.c.l.b16 %v535
        %v673 = vunpack.c.h.b16 %v535
        %v674 = vunpack.c.l.b16 %v536
        %v675 = vunpack.c.h.b16 %v536
        %v676 = vunpack.c.l.b16 %v537
        %v677 = vunpack.c.h.b16 %v537
        %v678 = vunpack.c.l.b16 %v538
        %v679 = vunpack.c.h.b16 %v538
        %v680 = vunpack.c.l.b16 %v539
        %v681 = vunpack.c.h.b16 %v539
        %v682 = vunpack.c.l.b16 %v540
        %v683 = vunpack.c.h.b16 %v540
        %v684 = vunpack.c.l.b16 %v541
        %v685 = vunpack.c.h.b16 %v541
        %v686 = vpack.c.b16 %v592, %v590
        %v687 = vpack.c.b16 %v593, %v591
        %v688 = vpack.c.b16 %v596, %v594
        %v689 = vpack.c.b16 %v597, %v595
        %v690 = vpack.c.b16 %v600, %v598
        %v691 = vpack.c.b16 %v601, %v599
        %v692 = vpack.c.b16 %v604, %v602
        %v693 = vpack.c.b16 %v605, %v603
        %v694 = vpack.c.b16 %v608, %v606
        %v695 = vpack.c.b16 %v609, %v607
        %v696 = vpack.c.b16 %v612, %v610
        %v697 = vpack.c.b16 %v613, %v611
        %v698 = vpack.c.b16 %v616, %v614
        %v699 = vpack.c.b16 %v617, %v615
        %v700 = vpack.c.b16 %v620, %v618
        %v701 = vpack.c.b16 %v621, %v619
        %v702 = vpack.c.b16 %v624, %v622
        %v703 = vpack.c.b16 %v625, %v623
        %v704 = vpack.c.b16 %v628, %v626
        %v705 = vpack.c.b16 %v629, %v627
        %v706 = vpack.c.b16 %v632, %v630
        %v707 = vpack.c.b16 %v633, %v631
        %v708 = vpack.c.b16 %v636, %v634
        %v709 = vpack.c.b16 %v637, %v635
        %v710 = vpack.c.b16 %v640, %v638
        %v711 = vpack.c.b16 %v641, %v639
        %v712 = vpack.c.b16 %v644, %v642
        %v713 = vpack.c.b16 %v645, %v643
        %v714 = vpack.c.b16 %v648, %v646
        %v715 = vpack.c.b16 %v649, %v647
        %v716 = vpack.c.b16 %v652, %v650
        %v717 = vpack.c.b16 %v653, %v651
        %v718 = vpack.c.b16 %v656, %v654
        %v719 = vpack.c.b16 %v657, %v655
        %v720 = vpack.c.b16 %v660, %v658
        %v721 = vpack.c.b16 %v661, %v659
        %v722 = vpack.c.b16 %v664, %v662
        %v723 = vpack.c.b16 %v665, %v663
        %v724 = vpack.c.b16 %v668, %v666
        %v725 = vpack.c.b16 %v669, %v667
        %v726 = vpack.c.b16 %v672, %v670
        %v727 = vpack.c.b16 %v673, %v671
        %v728 = vpack.c.b16 %v676, %v674
        %v729 = vpack.c.b16 %v677, %v675
        %v730 = vpack.c.b16 %v680, %v678
        %v731 = vpack.c.b16 %v681, %v679
        %v732 = vpack.c.b16 %v684, %v682
        %v733 = vpack.c.b16 %v685, %v683
        %782 = vmatprep.subr.bf16.mxu0 %v701
        %783 = vmatpush1.bf16.msra.mxu0 %v700
        %784 = vmatprep.subr.bf16.mxu0 %v699
        %785 = vmatpush1.bf16.msra.mxu0 %v698
        %786 = vmatprep.subr.bf16.mxu0 %v697
        %787 = vmatpush1.bf16.msra.mxu0 %v696
        %788 = vmatprep.subr.bf16.mxu0 %v695
        %789 = vmatpush1.bf16.msra.mxu0 %v694
        %790 = vmatprep.subr.bf16.mxu0 %v693
        %791 = vmatpush1.bf16.msra.mxu0 %v692
        %792 = vmatprep.subr.bf16.mxu0 %v691
        %793 = vmatpush1.bf16.msra.mxu0 %v690
        %794 = vmatprep.subr.bf16.mxu0 %v689
        %795 = vmatpush1.bf16.msra.mxu0 %v688
        %796 = vmatprep.subr.bf16.mxu0 %v687
        %797 = vmatpush1.bf16.msra.mxu0 %v686
        %798 = vmatprep.subr.bf16.mxu0 %v717
        %799 = vmatpush2.bf16.msra.mxu0 %v716
        %800 = vmatprep.subr.bf16.mxu0 %v715
        %801 = vmatpush2.bf16.msra.mxu0 %v714
        %802 = vmatprep.subr.bf16.mxu0 %v713
        %803 = vmatpush2.bf16.msra.mxu0 %v712
        %804 = vmatprep.subr.bf16.mxu0 %v711
        %805 = vmatpush2.bf16.msra.mxu0 %v710
        %806 = vmatprep.subr.bf16.mxu0 %v709
        %807 = vmatpush2.bf16.msra.mxu0 %v708
        %808 = vmatprep.subr.bf16.mxu0 %v707
        %809 = vmatpush2.bf16.msra.mxu0 %v706
        %810 = vmatprep.subr.bf16.mxu0 %v705
        %811 = vmatpush2.bf16.msra.mxu0 %v704
        %812 = vmatprep.subr.bf16.mxu0 %v703
        %813 = vmatpush2.bf16.msra.mxu0 %v702
        %814 = vmatprep.mubr.bf16.mxu0 %v443
        %815 = vmatmul.mubr.bf16.gmra.mxu0 %v492
        %v816 = vpop.f32.mrf.mxu0
        %v817 = vadd.f32 0.0, %v816
        %v818 = vpop.f32.mrf.mxu0
        %v819 = vadd.f32 0.0, %v818
        %v820 = vpop.f32.mrf.mxu0
        %v821 = vadd.f32 0.0, %v820
        %v822 = vpop.f32.mrf.mxu0
        %v823 = vadd.f32 0.0, %v822
        %824 = vdwg.mxu0
        %825 = vmatprep.subr.bf16.mxu0 %v733
        %826 = vmatpush1.bf16.msra.mxu0 %v732
        %827 = vmatprep.subr.bf16.mxu0 %v731
        %828 = vmatpush1.bf16.msra.mxu0 %v730
        %829 = vmatprep.subr.bf16.mxu0 %v729
        %830 = vmatpush1.bf16.msra.mxu0 %v728
        %831 = vmatprep.subr.bf16.mxu0 %v727
        %832 = vmatpush1.bf16.msra.mxu0 %v726
        %833 = vmatprep.subr.bf16.mxu0 %v725
        %834 = vmatpush1.bf16.msra.mxu0 %v724
        %835 = vmatprep.subr.bf16.mxu0 %v723
        %836 = vmatpush1.bf16.msra.mxu0 %v722
        %837 = vmatprep.subr.bf16.mxu0 %v721
        %838 = vmatpush1.bf16.msra.mxu0 %v720
        %839 = vmatprep.subr.bf16.mxu0 %v719
        %840 = vmatpush1.bf16.msra.mxu0 %v718
        %841 = vmatprep.subr.bf16.mxu0 0
        %842 = vmatpush2.bf16.msra.mxu0 0
        %843 = vmatprep.subr.bf16.mxu0 0
        %844 = vmatpush2.bf16.msra.mxu0 0
        %845 = vmatprep.subr.bf16.mxu0 0
        %846 = vmatpush2.bf16.msra.mxu0 0
        %847 = vmatprep.subr.bf16.mxu0 0
        %848 = vmatpush2.bf16.msra.mxu0 0
        %849 = vmatprep.subr.bf16.mxu0 0
        %850 = vmatpush2.bf16.msra.mxu0 0
        %851 = vmatprep.subr.bf16.mxu0 0
        %852 = vmatpush2.bf16.msra.mxu0 0
        %853 = vmatprep.subr.bf16.mxu0 0
        %854 = vmatpush2.bf16.msra.mxu0 0
        %855 = vmatprep.subr.bf16.mxu0 0
        %856 = vmatpush2.bf16.msra.mxu0 0
        %857 = vmatprep.mubr.bf16.mxu0 0
        %858 = vmatmul.mubr.bf16.gmra.mxu0 %v493
        %v859 = vpop.f32.mrf.mxu0
        %v860 = vadd.f32 %v817, %v859
        %v861 = vpop.f32.mrf.mxu0
        %v862 = vadd.f32 %v819, %v861
        %v863 = vpop.f32.mrf.mxu0
        %v864 = vadd.f32 %v821, %v863
        %v865 = vpop.f32.mrf.mxu0
        %v866 = vadd.f32 %v823, %v865
        %867 = vdwg.mxu0
        %v868 = vld [vmem:[%s5] sm:$0x3]
        %v870 = vlaneseq
        %v871 = vshrl.u32 %v870, 7
        %v872 = vsub.s32 0, %v871
        %v873 = vrot.slane %v868, %v872
        %v874 = vlaneseq
        %v875 = vshrl.u32 %v874, 7
        %v876 = vsub.s32 1, %v875
        %v877 = vrot.slane %v868, %v876
        %v880 = vmul.f32 %v860, %v873
        %v881 = vmul.f32 %v862, %v877
        %v882 = vmul.f32 %v864, %v873
        %v883 = vmul.f32 %v866, %v877
        %v884 = vld [vmem:[%s6] sm:$0x3]
        %v886 = vlaneseq
        %v887 = vshrl.u32 %v886, 7
        %v888 = vsub.s32 0, %v887
        %v889 = vrot.slane %v884, %v888
        %v890 = vlaneseq
        %v891 = vshrl.u32 %v890, 7
        %v892 = vsub.s32 1, %v891
        %v893 = vrot.slane %v884, %v892
        %v896 = vadd.f32 %v880, %v889
        %v897 = vadd.f32 %v881, %v893
        %v898 = vadd.f32 %v882, %v889
        %v899 = vadd.f32 %v883, %v893
        %v900 = vmax.f32 %v896, 0.0
        %v901 = vmax.f32 %v897, 0.0
        %v902 = vmax.f32 %v898, 0.0
        %v903 = vmax.f32 %v899, 0.0
        %vm908 = vcmask 1041408
        %v909 = vrot.slane %v900, 6
        %v910 = vrot.slane %v901, 6
        %v911 = vrot.slane %v902, 6
        %v912 = vsel %vm908, %v909, %v911
        %v913 = vrot.slane %v903, 6
        %v914 = vsel %vm908, %v910, %v913
        %v919 = vsel %vm908, 0.0, %v909
        %v920 = vsel %vm908, 0.0, %v910
        %vm921 = vcmask 1045504
        %v922 = vrot.slane %v900, 2
        %v923 = vrot.slane %v902, 2
        %v924 = vsel %vm921, %v922, %v923
        %v925 = vrot.slane %v901, 2
        %v926 = vrot.slane %v903, 2
        %v927 = vsel %vm921, %v925, %v926
        %v932 = vsel %vm921, %v923, 0.0
        %v933 = vsel %vm921, %v926, 0.0
        %v934 = vpack.c.bf16 %v912, %v919
        %v935 = vpack.c.bf16 %v914, %v920
        %v936 = vpack.c.bf16 %v902, %v900
        %v937 = vpack.c.bf16 %v903, %v901
        %v938 = vpack.c.bf16 %v932, %v924
        %v939 = vpack.c.bf16 %v933, %v927
        %v940 = vld [vmem:[#allocation10] sm:$0xff]
        %v941 = vld [vmem:[#allocation10 + $0x8] sm:$0xff]
        %v942 = vld [vmem:[#allocation10 + $0x10] sm:$0xff]
        %v943 = vld [vmem:[#allocation10 + $0x18] sm:$0xff]
        %v944 = vld [vmem:[#allocation10 + $0x20] sm:$0xff]
        %v945 = vld [vmem:[#allocation10 + $0x28] sm:$0xff]
        %v946 = vld [vmem:[#allocation10 + $0x30] sm:$0xff]
        %v947 = vld [vmem:[#allocation10 + $0x38] sm:$0xff]
        %v948 = vld [vmem:[#allocation10 + $0x40] sm:$0xff]
        %v949 = vld [vmem:[#allocation10 + $0x48] sm:$0xff]
        %v950 = vld [vmem:[#allocation10 + $0x50] sm:$0xff]
        %v951 = vld [vmem:[#allocation10 + $0x58] sm:$0xff]
        %v952 = vld [vmem:[#allocation10 + $0x60] sm:$0xff]
        %v953 = vld [vmem:[#allocation10 + $0x68] sm:$0xff]
        %v954 = vld [vmem:[#allocation10 + $0x70] sm:$0xff]
        %v955 = vld [vmem:[#allocation10 + $0x78] sm:$0xff]
        %v956 = vld [vmem:[#allocation10 + $0x80] sm:$0xff]
        %v957 = vld [vmem:[#allocation10 + $0x88] sm:$0xff]
        %v958 = vld [vmem:[#allocation10 + $0x90] sm:$0xff]
        %v959 = vld [vmem:[#allocation10 + $0x98] sm:$0xff]
        %v960 = vld [vmem:[#allocation10 + $0xa0] sm:$0xff]
        %v961 = vld [vmem:[#allocation10 + $0xa8] sm:$0xff]
        %v962 = vld [vmem:[#allocation10 + $0xb0] sm:$0xff]
        %v963 = vld [vmem:[#allocation10 + $0xb8] sm:$0xff]
        %v964 = vld [vmem:[#allocation10 + $0xc0] sm:$0xff]
        %v965 = vld [vmem:[#allocation10 + $0xc8] sm:$0xff]
        %v966 = vld [vmem:[#allocation10 + $0xd0] sm:$0xff]
        %v967 = vld [vmem:[#allocation10 + $0xd8] sm:$0xff]
        %v968 = vld [vmem:[#allocation10 + $0xe0] sm:$0xff]
        %v969 = vld [vmem:[#allocation10 + $0xe8] sm:$0xff]
        %v970 = vld [vmem:[#allocation10 + $0xf0] sm:$0xff]
        %v971 = vld [vmem:[#allocation10 + $0xf8] sm:$0xff]
        %v972 = vld [vmem:[#allocation10 + $0x100] sm:$0xff]
        %v973 = vld [vmem:[#allocation10 + $0x108] sm:$0xff]
        %v974 = vld [vmem:[#allocation10 + $0x110] sm:$0xff]
        %v975 = vld [vmem:[#allocation10 + $0x118] sm:$0xff]
        %v976 = vld [vmem:[#allocation10 + $0x120] sm:$0xff]
        %v977 = vld [vmem:[#allocation10 + $0x128] sm:$0xff]
        %v978 = vld [vmem:[#allocation10 + $0x130] sm:$0xff]
        %v979 = vld [vmem:[#allocation10 + $0x138] sm:$0xff]
        %v980 = vld [vmem:[#allocation10 + $0x140] sm:$0xff]
        %v981 = vld [vmem:[#allocation10 + $0x148] sm:$0xff]
        %v982 = vld [vmem:[#allocation10 + $0x150] sm:$0xff]
        %v983 = vld [vmem:[#allocation10 + $0x158] sm:$0xff]
        %v984 = vld [vmem:[#allocation10 + $0x160] sm:$0xff]
        %v985 = vld [vmem:[#allocation10 + $0x168] sm:$0xff]
        %v986 = vld [vmem:[#allocation10 + $0x170] sm:$0xff]
        %v987 = vld [vmem:[#allocation10 + $0x178] sm:$0xff]
        %v988 = vld [vmem:[#allocation10 + $0x180] sm:$0xff]
        %v989 = vld [vmem:[#allocation10 + $0x188] sm:$0xff]
        %v990 = vld [vmem:[#allocation10 + $0x190] sm:$0xff]
        %v991 = vld [vmem:[#allocation10 + $0x198] sm:$0xff]
        %v992 = vld [vmem:[#allocation10 + $0x1a0] sm:$0xff]
        %v993 = vld [vmem:[#allocation10 + $0x1a8] sm:$0xff]
        %v994 = vld [vmem:[#allocation10 + $0x1b0] sm:$0xff]
        %v995 = vld [vmem:[#allocation10 + $0x1b8] sm:$0xff]
        %v996 = vld [vmem:[#allocation10 + $0x1c0] sm:$0xff]
        %v997 = vld [vmem:[#allocation10 + $0x1c8] sm:$0xff]
        %v998 = vld [vmem:[#allocation10 + $0x1d0] sm:$0xff]
        %v999 = vld [vmem:[#allocation10 + $0x1d8] sm:$0xff]
        %v1000 = vld [vmem:[#allocation10 + $0x1e0] sm:$0xff]
        %v1001 = vld [vmem:[#allocation10 + $0x1e8] sm:$0xff]
        %v1002 = vld [vmem:[#allocation10 + $0x1f0] sm:$0xff]
        %v1003 = vld [vmem:[#allocation10 + $0x1f8] sm:$0xff]
        %v1004 = vld [vmem:[#allocation10 + $0x200] sm:$0xff]
        %v1005 = vld [vmem:[#allocation10 + $0x208] sm:$0xff]
        %v1006 = vld [vmem:[#allocation10 + $0x210] sm:$0xff]
        %v1007 = vld [vmem:[#allocation10 + $0x218] sm:$0xff]
        %v1008 = vld [vmem:[#allocation10 + $0x220] sm:$0xff]
        %v1009 = vld [vmem:[#allocation10 + $0x228] sm:$0xff]
        %v1010 = vld [vmem:[#allocation10 + $0x230] sm:$0xff]
        %v1011 = vld [vmem:[#allocation10 + $0x238] sm:$0xff]
        %v1012 = vld [vmem:[#allocation10 + $0x240] sm:$0xff]
        %v1013 = vld [vmem:[#allocation10 + $0x248] sm:$0xff]
        %v1014 = vld [vmem:[#allocation10 + $0x250] sm:$0xff]
        %v1015 = vld [vmem:[#allocation10 + $0x258] sm:$0xff]
        %v1016 = vld [vmem:[#allocation10 + $0x260] sm:$0xff]
        %v1017 = vld [vmem:[#allocation10 + $0x268] sm:$0xff]
        %v1018 = vld [vmem:[#allocation10 + $0x270] sm:$0xff]
        %v1019 = vld [vmem:[#allocation10 + $0x278] sm:$0xff]
        %v1020 = vld [vmem:[#allocation10 + $0x280] sm:$0xff]
        %v1021 = vld [vmem:[#allocation10 + $0x288] sm:$0xff]
        %v1022 = vld [vmem:[#allocation10 + $0x290] sm:$0xff]
        %v1023 = vld [vmem:[#allocation10 + $0x298] sm:$0xff]
        %v1024 = vld [vmem:[#allocation10 + $0x2a0] sm:$0xff]
        %v1025 = vld [vmem:[#allocation10 + $0x2a8] sm:$0xff]
        %v1026 = vld [vmem:[#allocation10 + $0x2b0] sm:$0xff]
        %v1027 = vld [vmem:[#allocation10 + $0x2b8] sm:$0xff]
        %v1028 = vld [vmem:[#allocation10 + $0x2c0] sm:$0xff]
        %v1029 = vld [vmem:[#allocation10 + $0x2c8] sm:$0xff]
        %v1030 = vld [vmem:[#allocation10 + $0x2d0] sm:$0xff]
        %v1031 = vld [vmem:[#allocation10 + $0x2d8] sm:$0xff]
        %v1032 = vld [vmem:[#allocation10 + $0x2e0] sm:$0xff]
        %v1033 = vld [vmem:[#allocation10 + $0x2e8] sm:$0xff]
        %v1034 = vld [vmem:[#allocation10 + $0x2f0] sm:$0xff]
        %v1035 = vld [vmem:[#allocation10 + $0x2f8] sm:$0xff]
        %v1036 = vld [vmem:[#allocation10 + $0x300] sm:$0xff]
        %v1037 = vld [vmem:[#allocation10 + $0x308] sm:$0xff]
        %v1038 = vld [vmem:[#allocation10 + $0x310] sm:$0xff]
        %v1039 = vld [vmem:[#allocation10 + $0x318] sm:$0xff]
        %v1040 = vld [vmem:[#allocation10 + $0x320] sm:$0xff]
        %v1041 = vld [vmem:[#allocation10 + $0x328] sm:$0xff]
        %v1042 = vld [vmem:[#allocation10 + $0x330] sm:$0xff]
        %v1043 = vld [vmem:[#allocation10 + $0x338] sm:$0xff]
        %v1044 = vld [vmem:[#allocation10 + $0x340] sm:$0xff]
        %v1045 = vld [vmem:[#allocation10 + $0x348] sm:$0xff]
        %v1046 = vld [vmem:[#allocation10 + $0x350] sm:$0xff]
        %v1047 = vld [vmem:[#allocation10 + $0x358] sm:$0xff]
        %v1048 = vld [vmem:[#allocation10 + $0x360] sm:$0xff]
        %v1049 = vld [vmem:[#allocation10 + $0x368] sm:$0xff]
        %v1050 = vld [vmem:[#allocation10 + $0x370] sm:$0xff]
        %v1051 = vld [vmem:[#allocation10 + $0x378] sm:$0xff]
        %v1052 = vld [vmem:[#allocation10 + $0x380] sm:$0xff]
        %v1053 = vld [vmem:[#allocation10 + $0x388] sm:$0xff]
        %v1054 = vld [vmem:[#allocation10 + $0x390] sm:$0xff]
        %v1055 = vld [vmem:[#allocation10 + $0x398] sm:$0xff]
        %v1056 = vld [vmem:[#allocation10 + $0x3a0] sm:$0xff]
        %v1057 = vld [vmem:[#allocation10 + $0x3a8] sm:$0xff]
        %v1058 = vld [vmem:[#allocation10 + $0x3b0] sm:$0xff]
        %v1059 = vld [vmem:[#allocation10 + $0x3b8] sm:$0xff]
        %v1060 = vld [vmem:[#allocation10 + $0x3c0] sm:$0xff]
        %v1061 = vld [vmem:[#allocation10 + $0x3c8] sm:$0xff]
        %v1062 = vld [vmem:[#allocation10 + $0x3d0] sm:$0xff]
        %v1063 = vld [vmem:[#allocation10 + $0x3d8] sm:$0xff]
        %v1064 = vld [vmem:[#allocation10 + $0x3e0] sm:$0xff]
        %v1065 = vld [vmem:[#allocation10 + $0x3e8] sm:$0xff]
        %v1066 = vld [vmem:[#allocation10 + $0x3f0] sm:$0xff]
        %v1067 = vld [vmem:[#allocation10 + $0x3f8] sm:$0xff]
        %v1068 = vld [vmem:[#allocation10 + $0x400] sm:$0xff]
        %v1069 = vld [vmem:[#allocation10 + $0x408] sm:$0xff]
        %v1070 = vld [vmem:[#allocation10 + $0x410] sm:$0xff]
        %v1071 = vld [vmem:[#allocation10 + $0x418] sm:$0xff]
        %v1072 = vld [vmem:[#allocation10 + $0x420] sm:$0xff]
        %v1073 = vld [vmem:[#allocation10 + $0x428] sm:$0xff]
        %v1074 = vld [vmem:[#allocation10 + $0x430] sm:$0xff]
        %v1075 = vld [vmem:[#allocation10 + $0x438] sm:$0xff]
        %v1076 = vld [vmem:[#allocation10 + $0x440] sm:$0xff]
        %v1077 = vld [vmem:[#allocation10 + $0x448] sm:$0xff]
        %v1078 = vld [vmem:[#allocation10 + $0x450] sm:$0xff]
        %v1079 = vld [vmem:[#allocation10 + $0x458] sm:$0xff]
        %v1080 = vld [vmem:[#allocation10 + $0x460] sm:$0xff]
        %v1081 = vld [vmem:[#allocation10 + $0x468] sm:$0xff]
        %v1082 = vld [vmem:[#allocation10 + $0x470] sm:$0xff]
        %v1083 = vld [vmem:[#allocation10 + $0x478] sm:$0xff]
        %v1084 = vld [vmem:[#allocation10 + $0x480] sm:$0xff]
        %v1085 = vld [vmem:[#allocation10 + $0x488] sm:$0xff]
        %v1086 = vld [vmem:[#allocation10 + $0x490] sm:$0xff]
        %v1087 = vld [vmem:[#allocation10 + $0x498] sm:$0xff]
        %v1088 = vld [vmem:[#allocation10 + $0x4a0] sm:$0xff]
        %v1089 = vld [vmem:[#allocation10 + $0x4a8] sm:$0xff]
        %v1090 = vld [vmem:[#allocation10 + $0x4b0] sm:$0xff]
        %v1091 = vld [vmem:[#allocation10 + $0x4b8] sm:$0xff]
        %v1092 = vld [vmem:[#allocation10 + $0x4c0] sm:$0xff]
        %v1093 = vld [vmem:[#allocation10 + $0x4c8] sm:$0xff]
        %v1094 = vld [vmem:[#allocation10 + $0x4d0] sm:$0xff]
        %v1095 = vld [vmem:[#allocation10 + $0x4d8] sm:$0xff]
        %v1096 = vld [vmem:[#allocation10 + $0x4e0] sm:$0xff]
        %v1097 = vld [vmem:[#allocation10 + $0x4e8] sm:$0xff]
        %v1098 = vld [vmem:[#allocation10 + $0x4f0] sm:$0xff]
        %v1099 = vld [vmem:[#allocation10 + $0x4f8] sm:$0xff]
        %v1100 = vld [vmem:[#allocation10 + $0x500] sm:$0xff]
        %v1101 = vld [vmem:[#allocation10 + $0x508] sm:$0xff]
        %v1102 = vld [vmem:[#allocation10 + $0x510] sm:$0xff]
        %v1103 = vld [vmem:[#allocation10 + $0x518] sm:$0xff]
        %v1104 = vld [vmem:[#allocation10 + $0x520] sm:$0xff]
        %v1105 = vld [vmem:[#allocation10 + $0x528] sm:$0xff]
        %v1106 = vld [vmem:[#allocation10 + $0x530] sm:$0xff]
        %v1107 = vld [vmem:[#allocation10 + $0x538] sm:$0xff]
        %v1108 = vld [vmem:[#allocation10 + $0x540] sm:$0xff]
        %v1109 = vld [vmem:[#allocation10 + $0x548] sm:$0xff]
        %v1110 = vld [vmem:[#allocation10 + $0x550] sm:$0xff]
        %v1111 = vld [vmem:[#allocation10 + $0x558] sm:$0xff]
        %v1112 = vld [vmem:[#allocation10 + $0x560] sm:$0xff]
        %v1113 = vld [vmem:[#allocation10 + $0x568] sm:$0xff]
        %v1114 = vld [vmem:[#allocation10 + $0x570] sm:$0xff]
        %v1115 = vld [vmem:[#allocation10 + $0x578] sm:$0xff]
        %v1116 = vld [vmem:[#allocation10 + $0x580] sm:$0xff]
        %v1117 = vld [vmem:[#allocation10 + $0x588] sm:$0xff]
        %v1118 = vld [vmem:[#allocation10 + $0x590] sm:$0xff]
        %v1119 = vld [vmem:[#allocation10 + $0x598] sm:$0xff]
        %v1120 = vld [vmem:[#allocation10 + $0x5a0] sm:$0xff]
        %v1121 = vld [vmem:[#allocation10 + $0x5a8] sm:$0xff]
        %v1122 = vld [vmem:[#allocation10 + $0x5b0] sm:$0xff]
        %v1123 = vld [vmem:[#allocation10 + $0x5b8] sm:$0xff]
        %v1124 = vld [vmem:[#allocation10 + $0x5c0] sm:$0xff]
        %v1125 = vld [vmem:[#allocation10 + $0x5c8] sm:$0xff]
        %v1126 = vld [vmem:[#allocation10 + $0x5d0] sm:$0xff]
        %v1127 = vld [vmem:[#allocation10 + $0x5d8] sm:$0xff]
        %v1128 = vld [vmem:[#allocation10 + $0x5e0] sm:$0xff]
        %v1129 = vld [vmem:[#allocation10 + $0x5e8] sm:$0xff]
        %v1130 = vld [vmem:[#allocation10 + $0x5f0] sm:$0xff]
        %v1131 = vld [vmem:[#allocation10 + $0x5f8] sm:$0xff]
        %v1324 = vunpack.c.l.b16 %v940
        %v1325 = vunpack.c.h.b16 %v940
        %v1326 = vunpack.c.l.b16 %v941
        %v1327 = vunpack.c.h.b16 %v941
        %v1328 = vunpack.c.l.b16 %v942
        %v1329 = vunpack.c.h.b16 %v942
        %v1330 = vunpack.c.l.b16 %v943
        %v1331 = vunpack.c.h.b16 %v943
        %v1332 = vunpack.c.l.b16 %v944
        %v1333 = vunpack.c.h.b16 %v944
        %v1334 = vunpack.c.l.b16 %v945
        %v1335 = vunpack.c.h.b16 %v945
        %v1336 = vunpack.c.l.b16 %v946
        %v1337 = vunpack.c.h.b16 %v946
        %v1338 = vunpack.c.l.b16 %v947
        %v1339 = vunpack.c.h.b16 %v947
        %v1340 = vunpack.c.l.b16 %v948
        %v1341 = vunpack.c.h.b16 %v948
        %v1342 = vunpack.c.l.b16 %v949
        %v1343 = vunpack.c.h.b16 %v949
        %v1344 = vunpack.c.l.b16 %v950
        %v1345 = vunpack.c.h.b16 %v950
        %v1346 = vunpack.c.l.b16 %v951
        %v1347 = vunpack.c.h.b16 %v951
        %v1348 = vunpack.c.l.b16 %v952
        %v1349 = vunpack.c.h.b16 %v952
        %v1350 = vunpack.c.l.b16 %v953
        %v1351 = vunpack.c.h.b16 %v953
        %v1352 = vunpack.c.l.b16 %v954
        %v1353 = vunpack.c.h.b16 %v954
        %v1354 = vunpack.c.l.b16 %v955
        %v1355 = vunpack.c.h.b16 %v955
        %v1356 = vunpack.c.l.b16 %v956
        %v1357 = vunpack.c.h.b16 %v956
        %v1358 = vunpack.c.l.b16 %v957
        %v1359 = vunpack.c.h.b16 %v957
        %v1360 = vunpack.c.l.b16 %v958
        %v1361 = vunpack.c.h.b16 %v958
        %v1362 = vunpack.c.l.b16 %v959
        %v1363 = vunpack.c.h.b16 %v959
        %v1364 = vunpack.c.l.b16 %v960
        %v1365 = vunpack.c.h.b16 %v960
        %v1366 = vunpack.c.l.b16 %v961
        %v1367 = vunpack.c.h.b16 %v961
        %v1368 = vunpack.c.l.b16 %v962
        %v1369 = vunpack.c.h.b16 %v962
        %v1370 = vunpack.c.l.b16 %v963
        %v1371 = vunpack.c.h.b16 %v963
        %v1372 = vunpack.c.l.b16 %v964
        %v1373 = vunpack.c.h.b16 %v964
        %v1374 = vunpack.c.l.b16 %v965
        %v1375 = vunpack.c.h.b16 %v965
        %v1376 = vunpack.c.l.b16 %v966
        %v1377 = vunpack.c.h.b16 %v966
        %v1378 = vunpack.c.l.b16 %v967
        %v1379 = vunpack.c.h.b16 %v967
        %v1380 = vunpack.c.l.b16 %v968
        %v1381 = vunpack.c.h.b16 %v968
        %v1382 = vunpack.c.l.b16 %v969
        %v1383 = vunpack.c.h.b16 %v969
        %v1384 = vunpack.c.l.b16 %v970
        %v1385 = vunpack.c.h.b16 %v970
        %v1386 = vunpack.c.l.b16 %v971
        %v1387 = vunpack.c.h.b16 %v971
        %v1388 = vunpack.c.l.b16 %v972
        %v1389 = vunpack.c.h.b16 %v972
        %v1390 = vunpack.c.l.b16 %v973
        %v1391 = vunpack.c.h.b16 %v973
        %v1392 = vunpack.c.l.b16 %v974
        %v1393 = vunpack.c.h.b16 %v974
        %v1394 = vunpack.c.l.b16 %v975
        %v1395 = vunpack.c.h.b16 %v975
        %v1396 = vunpack.c.l.b16 %v976
        %v1397 = vunpack.c.h.b16 %v976
        %v1398 = vunpack.c.l.b16 %v977
        %v1399 = vunpack.c.h.b16 %v977
        %v1400 = vunpack.c.l.b16 %v978
        %v1401 = vunpack.c.h.b16 %v978
        %v1402 = vunpack.c.l.b16 %v979
        %v1403 = vunpack.c.h.b16 %v979
        %v1404 = vunpack.c.l.b16 %v980
        %v1405 = vunpack.c.h.b16 %v980
        %v1406 = vunpack.c.l.b16 %v981
        %v1407 = vunpack.c.h.b16 %v981
        %v1408 = vunpack.c.l.b16 %v982
        %v1409 = vunpack.c.h.b16 %v982
        %v1410 = vunpack.c.l.b16 %v983
        %v1411 = vunpack.c.h.b16 %v983
        %v1412 = vunpack.c.l.b16 %v984
        %v1413 = vunpack.c.h.b16 %v984
        %v1414 = vunpack.c.l.b16 %v985
        %v1415 = vunpack.c.h.b16 %v985
        %v1416 = vunpack.c.l.b16 %v986
        %v1417 = vunpack.c.h.b16 %v986
        %v1418 = vunpack.c.l.b16 %v987
        %v1419 = vunpack.c.h.b16 %v987
        %v1420 = vunpack.c.l.b16 %v988
        %v1421 = vunpack.c.h.b16 %v988
        %v1422 = vunpack.c.l.b16 %v989
        %v1423 = vunpack.c.h.b16 %v989
        %v1424 = vunpack.c.l.b16 %v990
        %v1425 = vunpack.c.h.b16 %v990
        %v1426 = vunpack.c.l.b16 %v991
        %v1427 = vunpack.c.h.b16 %v991
        %v1428 = vunpack.c.l.b16 %v992
        %v1429 = vunpack.c.h.b16 %v992
        %v1430 = vunpack.c.l.b16 %v993
        %v1431 = vunpack.c.h.b16 %v993
        %v1432 = vunpack.c.l.b16 %v994
        %v1433 = vunpack.c.h.b16 %v994
        %v1434 = vunpack.c.l.b16 %v995
        %v1435 = vunpack.c.h.b16 %v995
        %v1436 = vunpack.c.l.b16 %v996
        %v1437 = vunpack.c.h.b16 %v996
        %v1438 = vunpack.c.l.b16 %v997
        %v1439 = vunpack.c.h.b16 %v997
        %v1440 = vunpack.c.l.b16 %v998
        %v1441 = vunpack.c.h.b16 %v998
        %v1442 = vunpack.c.l.b16 %v999
        %v1443 = vunpack.c.h.b16 %v999
        %v1444 = vunpack.c.l.b16 %v1000
        %v1445 = vunpack.c.h.b16 %v1000
        %v1446 = vunpack.c.l.b16 %v1001
        %v1447 = vunpack.c.h.b16 %v1001
        %v1448 = vunpack.c.l.b16 %v1002
        %v1449 = vunpack.c.h.b16 %v1002
        %v1450 = vunpack.c.l.b16 %v1003
        %v1451 = vunpack.c.h.b16 %v1003
        %v1452 = vunpack.c.l.b16 %v1004
        %v1453 = vunpack.c.h.b16 %v1004
        %v1454 = vunpack.c.l.b16 %v1005
        %v1455 = vunpack.c.h.b16 %v1005
        %v1456 = vunpack.c.l.b16 %v1006
        %v1457 = vunpack.c.h.b16 %v1006
        %v1458 = vunpack.c.l.b16 %v1007
        %v1459 = vunpack.c.h.b16 %v1007
        %v1460 = vunpack.c.l.b16 %v1008
        %v1461 = vunpack.c.h.b16 %v1008
        %v1462 = vunpack.c.l.b16 %v1009
        %v1463 = vunpack.c.h.b16 %v1009
        %v1464 = vunpack.c.l.b16 %v1010
        %v1465 = vunpack.c.h.b16 %v1010
        %v1466 = vunpack.c.l.b16 %v1011
        %v1467 = vunpack.c.h.b16 %v1011
        %v1468 = vunpack.c.l.b16 %v1012
        %v1469 = vunpack.c.h.b16 %v1012
        %v1470 = vunpack.c.l.b16 %v1013
        %v1471 = vunpack.c.h.b16 %v1013
        %v1472 = vunpack.c.l.b16 %v1014
        %v1473 = vunpack.c.h.b16 %v1014
        %v1474 = vunpack.c.l.b16 %v1015
        %v1475 = vunpack.c.h.b16 %v1015
        %v1476 = vunpack.c.l.b16 %v1016
        %v1477 = vunpack.c.h.b16 %v1016
        %v1478 = vunpack.c.l.b16 %v1017
        %v1479 = vunpack.c.h.b16 %v1017
        %v1480 = vunpack.c.l.b16 %v1018
        %v1481 = vunpack.c.h.b16 %v1018
        %v1482 = vunpack.c.l.b16 %v1019
        %v1483 = vunpack.c.h.b16 %v1019
        %v1484 = vunpack.c.l.b16 %v1020
        %v1485 = vunpack.c.h.b16 %v1020
        %v1486 = vunpack.c.l.b16 %v1021
        %v1487 = vunpack.c.h.b16 %v1021
        %v1488 = vunpack.c.l.b16 %v1022
        %v1489 = vunpack.c.h.b16 %v1022
        %v1490 = vunpack.c.l.b16 %v1023
        %v1491 = vunpack.c.h.b16 %v1023
        %v1492 = vunpack.c.l.b16 %v1024
        %v1493 = vunpack.c.h.b16 %v1024
        %v1494 = vunpack.c.l.b16 %v1025
        %v1495 = vunpack.c.h.b16 %v1025
        %v1496 = vunpack.c.l.b16 %v1026
        %v1497 = vunpack.c.h.b16 %v1026
        %v1498 = vunpack.c.l.b16 %v1027
        %v1499 = vunpack.c.h.b16 %v1027
        %v1500 = vunpack.c.l.b16 %v1028
        %v1501 = vunpack.c.h.b16 %v1028
        %v1502 = vunpack.c.l.b16 %v1029
        %v1503 = vunpack.c.h.b16 %v1029
        %v1504 = vunpack.c.l.b16 %v1030
        %v1505 = vunpack.c.h.b16 %v1030
        %v1506 = vunpack.c.l.b16 %v1031
        %v1507 = vunpack.c.h.b16 %v1031
        %v1508 = vunpack.c.l.b16 %v1032
        %v1509 = vunpack.c.h.b16 %v1032
        %v1510 = vunpack.c.l.b16 %v1033
        %v1511 = vunpack.c.h.b16 %v1033
        %v1512 = vunpack.c.l.b16 %v1034
        %v1513 = vunpack.c.h.b16 %v1034
        %v1514 = vunpack.c.l.b16 %v1035
        %v1515 = vunpack.c.h.b16 %v1035
        %v1516 = vunpack.c.l.b16 %v1036
        %v1517 = vunpack.c.h.b16 %v1036
        %v1518 = vunpack.c.l.b16 %v1037
        %v1519 = vunpack.c.h.b16 %v1037
        %v1520 = vunpack.c.l.b16 %v1038
        %v1521 = vunpack.c.h.b16 %v1038
        %v1522 = vunpack.c.l.b16 %v1039
        %v1523 = vunpack.c.h.b16 %v1039
        %v1524 = vunpack.c.l.b16 %v1040
        %v1525 = vunpack.c.h.b16 %v1040
        %v1526 = vunpack.c.l.b16 %v1041
        %v1527 = vunpack.c.h.b16 %v1041
        %v1528 = vunpack.c.l.b16 %v1042
        %v1529 = vunpack.c.h.b16 %v1042
        %v1530 = vunpack.c.l.b16 %v1043
        %v1531 = vunpack.c.h.b16 %v1043
        %v1532 = vunpack.c.l.b16 %v1044
        %v1533 = vunpack.c.h.b16 %v1044
        %v1534 = vunpack.c.l.b16 %v1045
        %v1535 = vunpack.c.h.b16 %v1045
        %v1536 = vunpack.c.l.b16 %v1046
        %v1537 = vunpack.c.h.b16 %v1046
        %v1538 = vunpack.c.l.b16 %v1047
        %v1539 = vunpack.c.h.b16 %v1047
        %v1540 = vunpack.c.l.b16 %v1048
        %v1541 = vunpack.c.h.b16 %v1048
        %v1542 = vunpack.c.l.b16 %v1049
        %v1543 = vunpack.c.h.b16 %v1049
        %v1544 = vunpack.c.l.b16 %v1050
        %v1545 = vunpack.c.h.b16 %v1050
        %v1546 = vunpack.c.l.b16 %v1051
        %v1547 = vunpack.c.h.b16 %v1051
        %v1548 = vunpack.c.l.b16 %v1052
        %v1549 = vunpack.c.h.b16 %v1052
        %v1550 = vunpack.c.l.b16 %v1053
        %v1551 = vunpack.c.h.b16 %v1053
        %v1552 = vunpack.c.l.b16 %v1054
        %v1553 = vunpack.c.h.b16 %v1054
        %v1554 = vunpack.c.l.b16 %v1055
        %v1555 = vunpack.c.h.b16 %v1055
        %v1556 = vunpack.c.l.b16 %v1056
        %v1557 = vunpack.c.h.b16 %v1056
        %v1558 = vunpack.c.l.b16 %v1057
        %v1559 = vunpack.c.h.b16 %v1057
        %v1560 = vunpack.c.l.b16 %v1058
        %v1561 = vunpack.c.h.b16 %v1058
        %v1562 = vunpack.c.l.b16 %v1059
        %v1563 = vunpack.c.h.b16 %v1059
        %v1564 = vunpack.c.l.b16 %v1060
        %v1565 = vunpack.c.h.b16 %v1060
        %v1566 = vunpack.c.l.b16 %v1061
        %v1567 = vunpack.c.h.b16 %v1061
        %v1568 = vunpack.c.l.b16 %v1062
        %v1569 = vunpack.c.h.b16 %v1062
        %v1570 = vunpack.c.l.b16 %v1063
        %v1571 = vunpack.c.h.b16 %v1063
        %v1572 = vunpack.c.l.b16 %v1064
        %v1573 = vunpack.c.h.b16 %v1064
        %v1574 = vunpack.c.l.b16 %v1065
        %v1575 = vunpack.c.h.b16 %v1065
        %v1576 = vunpack.c.l.b16 %v1066
        %v1577 = vunpack.c.h.b16 %v1066
        %v1578 = vunpack.c.l.b16 %v1067
        %v1579 = vunpack.c.h.b16 %v1067
        %v1580 = vunpack.c.l.b16 %v1068
        %v1581 = vunpack.c.h.b16 %v1068
        %v1582 = vunpack.c.l.b16 %v1069
        %v1583 = vunpack.c.h.b16 %v1069
        %v1584 = vunpack.c.l.b16 %v1070
        %v1585 = vunpack.c.h.b16 %v1070
        %v1586 = vunpack.c.l.b16 %v1071
        %v1587 = vunpack.c.h.b16 %v1071
        %v1588 = vunpack.c.l.b16 %v1072
        %v1589 = vunpack.c.h.b16 %v1072
        %v1590 = vunpack.c.l.b16 %v1073
        %v1591 = vunpack.c.h.b16 %v1073
        %v1592 = vunpack.c.l.b16 %v1074
        %v1593 = vunpack.c.h.b16 %v1074
        %v1594 = vunpack.c.l.b16 %v1075
        %v1595 = vunpack.c.h.b16 %v1075
        %v1596 = vunpack.c.l.b16 %v1076
        %v1597 = vunpack.c.h.b16 %v1076
        %v1598 = vunpack.c.l.b16 %v1077
        %v1599 = vunpack.c.h.b16 %v1077
        %v1600 = vunpack.c.l.b16 %v1078
        %v1601 = vunpack.c.h.b16 %v1078
        %v1602 = vunpack.c.l.b16 %v1079
        %v1603 = vunpack.c.h.b16 %v1079
        %v1604 = vunpack.c.l.b16 %v1080
        %v1605 = vunpack.c.h.b16 %v1080
        %v1606 = vunpack.c.l.b16 %v1081
        %v1607 = vunpack.c.h.b16 %v1081
        %v1608 = vunpack.c.l.b16 %v1082
        %v1609 = vunpack.c.h.b16 %v1082
        %v1610 = vunpack.c.l.b16 %v1083
        %v1611 = vunpack.c.h.b16 %v1083
        %v1612 = vunpack.c.l.b16 %v1084
        %v1613 = vunpack.c.h.b16 %v1084
        %v1614 = vunpack.c.l.b16 %v1085
        %v1615 = vunpack.c.h.b16 %v1085
        %v1616 = vunpack.c.l.b16 %v1086
        %v1617 = vunpack.c.h.b16 %v1086
        %v1618 = vunpack.c.l.b16 %v1087
        %v1619 = vunpack.c.h.b16 %v1087
        %v1620 = vunpack.c.l.b16 %v1088
        %v1621 = vunpack.c.h.b16 %v1088
        %v1622 = vunpack.c.l.b16 %v1089
        %v1623 = vunpack.c.h.b16 %v1089
        %v1624 = vunpack.c.l.b16 %v1090
        %v1625 = vunpack.c.h.b16 %v1090
        %v1626 = vunpack.c.l.b16 %v1091
        %v1627 = vunpack.c.h.b16 %v1091
        %v1628 = vunpack.c.l.b16 %v1092
        %v1629 = vunpack.c.h.b16 %v1092
        %v1630 = vunpack.c.l.b16 %v1093
        %v1631 = vunpack.c.h.b16 %v1093
        %v1632 = vunpack.c.l.b16 %v1094
        %v1633 = vunpack.c.h.b16 %v1094
        %v1634 = vunpack.c.l.b16 %v1095
        %v1635 = vunpack.c.h.b16 %v1095
        %v1636 = vunpack.c.l.b16 %v1096
        %v1637 = vunpack.c.h.b16 %v1096
        %v1638 = vunpack.c.l.b16 %v1097
        %v1639 = vunpack.c.h.b16 %v1097
        %v1640 = vunpack.c.l.b16 %v1098
        %v1641 = vunpack.c.h.b16 %v1098
        %v1642 = vunpack.c.l.b16 %v1099
        %v1643 = vunpack.c.h.b16 %v1099
        %v1644 = vunpack.c.l.b16 %v1100
        %v1645 = vunpack.c.h.b16 %v1100
        %v1646 = vunpack.c.l.b16 %v1101
        %v1647 = vunpack.c.h.b16 %v1101
        %v1648 = vunpack.c.l.b16 %v1102
        %v1649 = vunpack.c.h.b16 %v1102
        %v1650 = vunpack.c.l.b16 %v1103
        %v1651 = vunpack.c.h.b16 %v1103
        %v1652 = vunpack.c.l.b16 %v1104
        %v1653 = vunpack.c.h.b16 %v1104
        %v1654 = vunpack.c.l.b16 %v1105
        %v1655 = vunpack.c.h.b16 %v1105
        %v1656 = vunpack.c.l.b16 %v1106
        %v1657 = vunpack.c.h.b16 %v1106
        %v1658 = vunpack.c.l.b16 %v1107
        %v1659 = vunpack.c.h.b16 %v1107
        %v1660 = vunpack.c.l.b16 %v1108
        %v1661 = vunpack.c.h.b16 %v1108
        %v1662 = vunpack.c.l.b16 %v1109
        %v1663 = vunpack.c.h.b16 %v1109
        %v1664 = vunpack.c.l.b16 %v1110
        %v1665 = vunpack.c.h.b16 %v1110
        %v1666 = vunpack.c.l.b16 %v1111
        %v1667 = vunpack.c.h.b16 %v1111
        %v1668 = vunpack.c.l.b16 %v1112
        %v1669 = vunpack.c.h.b16 %v1112
        %v1670 = vunpack.c.l.b16 %v1113
        %v1671 = vunpack.c.h.b16 %v1113
        %v1672 = vunpack.c.l.b16 %v1114
        %v1673 = vunpack.c.h.b16 %v1114
        %v1674 = vunpack.c.l.b16 %v1115
        %v1675 = vunpack.c.h.b16 %v1115
        %v1676 = vunpack.c.l.b16 %v1116
        %v1677 = vunpack.c.h.b16 %v1116
        %v1678 = vunpack.c.l.b16 %v1117
        %v1679 = vunpack.c.h.b16 %v1117
        %v1680 = vunpack.c.l.b16 %v1118
        %v1681 = vunpack.c.h.b16 %v1118
        %v1682 = vunpack.c.l.b16 %v1119
        %v1683 = vunpack.c.h.b16 %v1119
        %v1684 = vunpack.c.l.b16 %v1120
        %v1685 = vunpack.c.h.b16 %v1120
        %v1686 = vunpack.c.l.b16 %v1121
        %v1687 = vunpack.c.h.b16 %v1121
        %v1688 = vunpack.c.l.b16 %v1122
        %v1689 = vunpack.c.h.b16 %v1122
        %v1690 = vunpack.c.l.b16 %v1123
        %v1691 = vunpack.c.h.b16 %v1123
        %v1692 = vunpack.c.l.b16 %v1124
        %v1693 = vunpack.c.h.b16 %v1124
        %v1694 = vunpack.c.l.b16 %v1125
        %v1695 = vunpack.c.h.b16 %v1125
        %v1696 = vunpack.c.l.b16 %v1126
        %v1697 = vunpack.c.h.b16 %v1126
        %v1698 = vunpack.c.l.b16 %v1127
        %v1699 = vunpack.c.h.b16 %v1127
        %v1700 = vunpack.c.l.b16 %v1128
        %v1701 = vunpack.c.h.b16 %v1128
        %v1702 = vunpack.c.l.b16 %v1129
        %v1703 = vunpack.c.h.b16 %v1129
        %v1704 = vunpack.c.l.b16 %v1130
        %v1705 = vunpack.c.h.b16 %v1130
        %v1706 = vunpack.c.l.b16 %v1131
        %v1707 = vunpack.c.h.b16 %v1131
        %v1708 = vpack.c.b16 %v1328, %v1324
        %v1709 = vpack.c.b16 %v1329, %v1325
        %v1710 = vpack.c.b16 %v1330, %v1326
        %v1711 = vpack.c.b16 %v1331, %v1327
        %v1712 = vpack.c.b16 %v1336, %v1332
        %v1713 = vpack.c.b16 %v1337, %v1333
        %v1714 = vpack.c.b16 %v1338, %v1334
        %v1715 = vpack.c.b16 %v1339, %v1335
        %v1716 = vpack.c.b16 %v1344, %v1340
        %v1717 = vpack.c.b16 %v1345, %v1341
        %v1718 = vpack.c.b16 %v1346, %v1342
        %v1719 = vpack.c.b16 %v1347, %v1343
        %v1720 = vpack.c.b16 %v1352, %v1348
        %v1721 = vpack.c.b16 %v1353, %v1349
        %v1722 = vpack.c.b16 %v1354, %v1350
        %v1723 = vpack.c.b16 %v1355, %v1351
        %v1724 = vpack.c.b16 %v1360, %v1356
        %v1725 = vpack.c.b16 %v1361, %v1357
        %v1726 = vpack.c.b16 %v1362, %v1358
        %v1727 = vpack.c.b16 %v1363, %v1359
        %v1728 = vpack.c.b16 %v1368, %v1364
        %v1729 = vpack.c.b16 %v1369, %v1365
        %v1730 = vpack.c.b16 %v1370, %v1366
        %v1731 = vpack.c.b16 %v1371, %v1367
        %v1732 = vpack.c.b16 %v1376, %v1372
        %v1733 = vpack.c.b16 %v1377, %v1373
        %v1734 = vpack.c.b16 %v1378, %v1374
        %v1735 = vpack.c.b16 %v1379, %v1375
        %v1736 = vpack.c.b16 %v1384, %v1380
        %v1737 = vpack.c.b16 %v1385, %v1381
        %v1738 = vpack.c.b16 %v1386, %v1382
        %v1739 = vpack.c.b16 %v1387, %v1383
        %v1740 = vpack.c.b16 %v1392, %v1388
        %v1741 = vpack.c.b16 %v1393, %v1389
        %v1742 = vpack.c.b16 %v1394, %v1390
        %v1743 = vpack.c.b16 %v1395, %v1391
        %v1744 = vpack.c.b16 %v1400, %v1396
        %v1745 = vpack.c.b16 %v1401, %v1397
        %v1746 = vpack.c.b16 %v1402, %v1398
        %v1747 = vpack.c.b16 %v1403, %v1399
        %v1748 = vpack.c.b16 %v1408, %v1404
        %v1749 = vpack.c.b16 %v1409, %v1405
        %v1750 = vpack.c.b16 %v1410, %v1406
        %v1751 = vpack.c.b16 %v1411, %v1407
        %v1752 = vpack.c.b16 %v1416, %v1412
        %v1753 = vpack.c.b16 %v1417, %v1413
        %v1754 = vpack.c.b16 %v1418, %v1414
        %v1755 = vpack.c.b16 %v1419, %v1415
        %v1756 = vpack.c.b16 %v1424, %v1420
        %v1757 = vpack.c.b16 %v1425, %v1421
        %v1758 = vpack.c.b16 %v1426, %v1422
        %v1759 = vpack.c.b16 %v1427, %v1423
        %v1760 = vpack.c.b16 %v1432, %v1428
        %v1761 = vpack.c.b16 %v1433, %v1429
        %v1762 = vpack.c.b16 %v1434, %v1430
        %v1763 = vpack.c.b16 %v1435, %v1431
        %v1764 = vpack.c.b16 %v1440, %v1436
        %v1765 = vpack.c.b16 %v1441, %v1437
        %v1766 = vpack.c.b16 %v1442, %v1438
        %v1767 = vpack.c.b16 %v1443, %v1439
        %v1768 = vpack.c.b16 %v1448, %v1444
        %v1769 = vpack.c.b16 %v1449, %v1445
        %v1770 = vpack.c.b16 %v1450, %v1446
        %v1771 = vpack.c.b16 %v1451, %v1447
        %v1772 = vpack.c.b16 %v1456, %v1452
        %v1773 = vpack.c.b16 %v1457, %v1453
        %v1774 = vpack.c.b16 %v1458, %v1454
        %v1775 = vpack.c.b16 %v1459, %v1455
        %v1776 = vpack.c.b16 %v1464, %v1460
        %v1777 = vpack.c.b16 %v1465, %v1461
        %v1778 = vpack.c.b16 %v1466, %v1462
        %v1779 = vpack.c.b16 %v1467, %v1463
        %v1780 = vpack.c.b16 %v1472, %v1468
        %v1781 = vpack.c.b16 %v1473, %v1469
        %v1782 = vpack.c.b16 %v1474, %v1470
        %v1783 = vpack.c.b16 %v1475, %v1471
        %v1784 = vpack.c.b16 %v1480, %v1476
        %v1785 = vpack.c.b16 %v1481, %v1477
        %v1786 = vpack.c.b16 %v1482, %v1478
        %v1787 = vpack.c.b16 %v1483, %v1479
        %v1788 = vpack.c.b16 %v1488, %v1484
        %v1789 = vpack.c.b16 %v1489, %v1485
        %v1790 = vpack.c.b16 %v1490, %v1486
        %v1791 = vpack.c.b16 %v1491, %v1487
        %v1792 = vpack.c.b16 %v1496, %v1492
        %v1793 = vpack.c.b16 %v1497, %v1493
        %v1794 = vpack.c.b16 %v1498, %v1494
        %v1795 = vpack.c.b16 %v1499, %v1495
        %v1796 = vpack.c.b16 %v1504, %v1500
        %v1797 = vpack.c.b16 %v1505, %v1501
        %v1798 = vpack.c.b16 %v1506, %v1502
        %v1799 = vpack.c.b16 %v1507, %v1503
        %v1800 = vpack.c.b16 %v1512, %v1508
        %v1801 = vpack.c.b16 %v1513, %v1509
        %v1802 = vpack.c.b16 %v1514, %v1510
        %v1803 = vpack.c.b16 %v1515, %v1511
        %v1804 = vpack.c.b16 %v1520, %v1516
        %v1805 = vpack.c.b16 %v1521, %v1517
        %v1806 = vpack.c.b16 %v1522, %v1518
        %v1807 = vpack.c.b16 %v1523, %v1519
        %v1808 = vpack.c.b16 %v1528, %v1524
        %v1809 = vpack.c.b16 %v1529, %v1525
        %v1810 = vpack.c.b16 %v1530, %v1526
        %v1811 = vpack.c.b16 %v1531, %v1527
        %v1812 = vpack.c.b16 %v1536, %v1532
        %v1813 = vpack.c.b16 %v1537, %v1533
        %v1814 = vpack.c.b16 %v1538, %v1534
        %v1815 = vpack.c.b16 %v1539, %v1535
        %v1816 = vpack.c.b16 %v1544, %v1540
        %v1817 = vpack.c.b16 %v1545, %v1541
        %v1818 = vpack.c.b16 %v1546, %v1542
        %v1819 = vpack.c.b16 %v1547, %v1543
        %v1820 = vpack.c.b16 %v1552, %v1548
        %v1821 = vpack.c.b16 %v1553, %v1549
        %v1822 = vpack.c.b16 %v1554, %v1550
        %v1823 = vpack.c.b16 %v1555, %v1551
        %v1824 = vpack.c.b16 %v1560, %v1556
        %v1825 = vpack.c.b16 %v1561, %v1557
        %v1826 = vpack.c.b16 %v1562, %v1558
        %v1827 = vpack.c.b16 %v1563, %v1559
        %v1828 = vpack.c.b16 %v1568, %v1564
        %v1829 = vpack.c.b16 %v1569, %v1565
        %v1830 = vpack.c.b16 %v1570, %v1566
        %v1831 = vpack.c.b16 %v1571, %v1567
        %v1832 = vpack.c.b16 %v1576, %v1572
        %v1833 = vpack.c.b16 %v1577, %v1573
        %v1834 = vpack.c.b16 %v1578, %v1574
        %v1835 = vpack.c.b16 %v1579, %v1575
        %v1836 = vpack.c.b16 %v1584, %v1580
        %v1837 = vpack.c.b16 %v1585, %v1581
        %v1838 = vpack.c.b16 %v1586, %v1582
        %v1839 = vpack.c.b16 %v1587, %v1583
        %v1840 = vpack.c.b16 %v1592, %v1588
        %v1841 = vpack.c.b16 %v1593, %v1589
        %v1842 = vpack.c.b16 %v1594, %v1590
        %v1843 = vpack.c.b16 %v1595, %v1591
        %v1844 = vpack.c.b16 %v1600, %v1596
        %v1845 = vpack.c.b16 %v1601, %v1597
        %v1846 = vpack.c.b16 %v1602, %v1598
        %v1847 = vpack.c.b16 %v1603, %v1599
        %v1848 = vpack.c.b16 %v1608, %v1604
        %v1849 = vpack.c.b16 %v1609, %v1605
        %v1850 = vpack.c.b16 %v1610, %v1606
        %v1851 = vpack.c.b16 %v1611, %v1607
        %v1852 = vpack.c.b16 %v1616, %v1612
        %v1853 = vpack.c.b16 %v1617, %v1613
        %v1854 = vpack.c.b16 %v1618, %v1614
        %v1855 = vpack.c.b16 %v1619, %v1615
        %v1856 = vpack.c.b16 %v1624, %v1620
        %v1857 = vpack.c.b16 %v1625, %v1621
        %v1858 = vpack.c.b16 %v1626, %v1622
        %v1859 = vpack.c.b16 %v1627, %v1623
        %v1860 = vpack.c.b16 %v1632, %v1628
        %v1861 = vpack.c.b16 %v1633, %v1629
        %v1862 = vpack.c.b16 %v1634, %v1630
        %v1863 = vpack.c.b16 %v1635, %v1631
        %v1864 = vpack.c.b16 %v1640, %v1636
        %v1865 = vpack.c.b16 %v1641, %v1637
        %v1866 = vpack.c.b16 %v1642, %v1638
        %v1867 = vpack.c.b16 %v1643, %v1639
        %v1868 = vpack.c.b16 %v1648, %v1644
        %v1869 = vpack.c.b16 %v1649, %v1645
        %v1870 = vpack.c.b16 %v1650, %v1646
        %v1871 = vpack.c.b16 %v1651, %v1647
        %v1872 = vpack.c.b16 %v1656, %v1652
        %v1873 = vpack.c.b16 %v1657, %v1653
        %v1874 = vpack.c.b16 %v1658, %v1654
        %v1875 = vpack.c.b16 %v1659, %v1655
        %v1876 = vpack.c.b16 %v1664, %v1660
        %v1877 = vpack.c.b16 %v1665, %v1661
        %v1878 = vpack.c.b16 %v1666, %v1662
        %v1879 = vpack.c.b16 %v1667, %v1663
        %v1880 = vpack.c.b16 %v1672, %v1668
        %v1881 = vpack.c.b16 %v1673, %v1669
        %v1882 = vpack.c.b16 %v1674, %v1670
        %v1883 = vpack.c.b16 %v1675, %v1671
        %v1884 = vpack.c.b16 %v1680, %v1676
        %v1885 = vpack.c.b16 %v1681, %v1677
        %v1886 = vpack.c.b16 %v1682, %v1678
        %v1887 = vpack.c.b16 %v1683, %v1679
        %v1888 = vpack.c.b16 %v1688, %v1684
        %v1889 = vpack.c.b16 %v1689, %v1685
        %v1890 = vpack.c.b16 %v1690, %v1686
        %v1891 = vpack.c.b16 %v1691, %v1687
        %v1892 = vpack.c.b16 %v1696, %v1692
        %v1893 = vpack.c.b16 %v1697, %v1693
        %v1894 = vpack.c.b16 %v1698, %v1694
        %v1895 = vpack.c.b16 %v1699, %v1695
        %v1896 = vpack.c.b16 %v1704, %v1700
        %v1897 = vpack.c.b16 %v1705, %v1701
        %v1898 = vpack.c.b16 %v1706, %v1702
        %v1899 = vpack.c.b16 %v1707, %v1703
        %2092 = vmatprep.subr.bf16.mxu0 %v1737
        %2093 = vmatpush1.bf16.msra.mxu0 %v1736
        %2094 = vmatprep.subr.bf16.mxu0 %v1733
        %2095 = vmatpush1.bf16.msra.mxu0 %v1732
        %2096 = vmatprep.subr.bf16.mxu0 %v1729
        %2097 = vmatpush1.bf16.msra.mxu0 %v1728
        %2098 = vmatprep.subr.bf16.mxu0 %v1725
        %2099 = vmatpush1.bf16.msra.mxu0 %v1724
        %2100 = vmatprep.subr.bf16.mxu0 %v1721
        %2101 = vmatpush1.bf16.msra.mxu0 %v1720
        %2102 = vmatprep.subr.bf16.mxu0 %v1717
        %2103 = vmatpush1.bf16.msra.mxu0 %v1716
        %2104 = vmatprep.subr.bf16.mxu0 %v1713
        %2105 = vmatpush1.bf16.msra.mxu0 %v1712
        %2106 = vmatprep.subr.bf16.mxu0 %v1709
        %2107 = vmatpush1.bf16.msra.mxu0 %v1708
        %2108 = vmatprep.subr.bf16.mxu0 %v1769
        %2109 = vmatpush2.bf16.msra.mxu0 %v1768
        %2110 = vmatprep.subr.bf16.mxu0 %v1765
        %2111 = vmatpush2.bf16.msra.mxu0 %v1764
        %2112 = vmatprep.subr.bf16.mxu0 %v1761
        %2113 = vmatpush2.bf16.msra.mxu0 %v1760
        %2114 = vmatprep.subr.bf16.mxu0 %v1757
        %2115 = vmatpush2.bf16.msra.mxu0 %v1756
        %2116 = vmatprep.subr.bf16.mxu0 %v1753
        %2117 = vmatpush2.bf16.msra.mxu0 %v1752
        %2118 = vmatprep.subr.bf16.mxu0 %v1749
        %2119 = vmatpush2.bf16.msra.mxu0 %v1748
        %2120 = vmatprep.subr.bf16.mxu0 %v1745
        %2121 = vmatpush2.bf16.msra.mxu0 %v1744
        %2122 = vmatprep.subr.bf16.mxu0 %v1741
        %2123 = vmatpush2.bf16.msra.mxu0 %v1740
        %2124 = vmatprep.mubr.bf16.mxu0 %v935
        %2125 = vmatmul.mubr.bf16.gmra.mxu0 %v934
        %v2126 = vpop.f32.mrf.mxu0
        %v2127 = vadd.f32 0.0, %v2126
        %v2128 = vpop.f32.mrf.mxu0
        %v2129 = vadd.f32 0.0, %v2128
        %v2130 = vpop.f32.mrf.mxu0
        %v2131 = vadd.f32 0.0, %v2130
        %v2132 = vpop.f32.mrf.mxu0
        %v2133 = vadd.f32 0.0, %v2132
        %2134 = vdwg.mxu0
        %2135 = vmatprep.subr.bf16.mxu0 %v1801
        %2136 = vmatpush1.bf16.msra.mxu0 %v1800
        %2137 = vmatprep.subr.bf16.mxu0 %v1797
        %2138 = vmatpush1.bf16.msra.mxu0 %v1796
        %2139 = vmatprep.subr.bf16.mxu0 %v1793
        %2140 = vmatpush1.bf16.msra.mxu0 %v1792
        %2141 = vmatprep.subr.bf16.mxu0 %v1789
        %2142 = vmatpush1.bf16.msra.mxu0 %v1788
        %2143 = vmatprep.subr.bf16.mxu0 %v1785
        %2144 = vmatpush1.bf16.msra.mxu0 %v1784
        %2145 = vmatprep.subr.bf16.mxu0 %v1781
        %2146 = vmatpush1.bf16.msra.mxu0 %v1780
        %2147 = vmatprep.subr.bf16.mxu0 %v1777
        %2148 = vmatpush1.bf16.msra.mxu0 %v1776
        %2149 = vmatprep.subr.bf16.mxu0 %v1773
        %2150 = vmatpush1.bf16.msra.mxu0 %v1772
        %2151 = vmatprep.subr.bf16.mxu0 %v1833
        %2152 = vmatpush2.bf16.msra.mxu0 %v1832
        %2153 = vmatprep.subr.bf16.mxu0 %v1829
        %2154 = vmatpush2.bf16.msra.mxu0 %v1828
        %2155 = vmatprep.subr.bf16.mxu0 %v1825
        %2156 = vmatpush2.bf16.msra.mxu0 %v1824
        %2157 = vmatprep.subr.bf16.mxu0 %v1821
        %2158 = vmatpush2.bf16.msra.mxu0 %v1820
        %2159 = vmatprep.subr.bf16.mxu0 %v1817
        %2160 = vmatpush2.bf16.msra.mxu0 %v1816
        %2161 = vmatprep.subr.bf16.mxu0 %v1813
        %2162 = vmatpush2.bf16.msra.mxu0 %v1812
        %2163 = vmatprep.subr.bf16.mxu0 %v1809
        %2164 = vmatpush2.bf16.msra.mxu0 %v1808
        %2165 = vmatprep.subr.bf16.mxu0 %v1805
        %2166 = vmatpush2.bf16.msra.mxu0 %v1804
        %2167 = vmatprep.mubr.bf16.mxu0 %v937
        %2168 = vmatmul.mubr.bf16.gmra.mxu0 %v936
        %v2169 = vpop.f32.mrf.mxu0
        %v2170 = vadd.f32 %v2127, %v2169
        %v2171 = vpop.f32.mrf.mxu0
        %v2172 = vadd.f32 %v2129, %v2171
        %v2173 = vpop.f32.mrf.mxu0
        %v2174 = vadd.f32 %v2131, %v2173
        %v2175 = vpop.f32.mrf.mxu0
        %v2176 = vadd.f32 %v2133, %v2175
        %2177 = vdwg.mxu0
        %2178 = vmatprep.subr.bf16.mxu0 %v1865
        %2179 = vmatpush1.bf16.msra.mxu0 %v1864
        %2180 = vmatprep.subr.bf16.mxu0 %v1861
        %2181 = vmatpush1.bf16.msra.mxu0 %v1860
        %2182 = vmatprep.subr.bf16.mxu0 %v1857
        %2183 = vmatpush1.bf16.msra.mxu0 %v1856
        %2184 = vmatprep.subr.bf16.mxu0 %v1853
        %2185 = vmatpush1.bf16.msra.mxu0 %v1852
        %2186 = vmatprep.subr.bf16.mxu0 %v1849
        %2187 = vmatpush1.bf16.msra.mxu0 %v1848
        %2188 = vmatprep.subr.bf16.mxu0 %v1845
        %2189 = vmatpush1.bf16.msra.mxu0 %v1844
        %2190 = vmatprep.subr.bf16.mxu0 %v1841
        %2191 = vmatpush1.bf16.msra.mxu0 %v1840
        %2192 = vmatprep.subr.bf16.mxu0 %v1837
        %2193 = vmatpush1.bf16.msra.mxu0 %v1836
        %2194 = vmatprep.subr.bf16.mxu0 %v1897
        %2195 = vmatpush2.bf16.msra.mxu0 %v1896
        %2196 = vmatprep.subr.bf16.mxu0 %v1893
        %2197 = vmatpush2.bf16.msra.mxu0 %v1892
        %2198 = vmatprep.subr.bf16.mxu0 %v1889
        %2199 = vmatpush2.bf16.msra.mxu0 %v1888
        %2200 = vmatprep.subr.bf16.mxu0 %v1885
        %2201 = vmatpush2.bf16.msra.mxu0 %v1884
        %2202 = vmatprep.subr.bf16.mxu0 %v1881
        %2203 = vmatpush2.bf16.msra.mxu0 %v1880
        %2204 = vmatprep.subr.bf16.mxu0 %v1877
        %2205 = vmatpush2.bf16.msra.mxu0 %v1876
        %2206 = vmatprep.subr.bf16.mxu0 %v1873
        %2207 = vmatpush2.bf16.msra.mxu0 %v1872
        %2208 = vmatprep.subr.bf16.mxu0 %v1869
        %2209 = vmatpush2.bf16.msra.mxu0 %v1868
        %2210 = vmatprep.mubr.bf16.mxu0 %v939
        %2211 = vmatmul.mubr.bf16.gmra.mxu0 %v938
        %v2212 = vpop.f32.mrf.mxu0
        %v2213 = vadd.f32 %v2170, %v2212
        %v2214 = vpop.f32.mrf.mxu0
        %v2215 = vadd.f32 %v2172, %v2214
        %v2216 = vpop.f32.mrf.mxu0
        %v2217 = vadd.f32 %v2174, %v2216
        %v2218 = vpop.f32.mrf.mxu0
        %v2219 = vadd.f32 %v2176, %v2218
        %2220 = vdwg.mxu0
        %2221 = vmatprep.subr.bf16.mxu0 %v1739
        %2222 = vmatpush1.bf16.msra.mxu0 %v1738
        %2223 = vmatprep.subr.bf16.mxu0 %v1735
        %2224 = vmatpush1.bf16.msra.mxu0 %v1734
        %2225 = vmatprep.subr.bf16.mxu0 %v1731
        %2226 = vmatpush1.bf16.msra.mxu0 %v1730
        %2227 = vmatprep.subr.bf16.mxu0 %v1727
        %2228 = vmatpush1.bf16.msra.mxu0 %v1726
        %2229 = vmatprep.subr.bf16.mxu0 %v1723
        %2230 = vmatpush1.bf16.msra.mxu0 %v1722
        %2231 = vmatprep.subr.bf16.mxu0 %v1719
        %2232 = vmatpush1.bf16.msra.mxu0 %v1718
        %2233 = vmatprep.subr.bf16.mxu0 %v1715
        %2234 = vmatpush1.bf16.msra.mxu0 %v1714
        %2235 = vmatprep.subr.bf16.mxu0 %v1711
        %2236 = vmatpush1.bf16.msra.mxu0 %v1710
        %2237 = vmatprep.subr.bf16.mxu0 %v1771
        %2238 = vmatpush2.bf16.msra.mxu0 %v1770
        %2239 = vmatprep.subr.bf16.mxu0 %v1767
        %2240 = vmatpush2.bf16.msra.mxu0 %v1766
        %2241 = vmatprep.subr.bf16.mxu0 %v1763
        %2242 = vmatpush2.bf16.msra.mxu0 %v1762
        %2243 = vmatprep.subr.bf16.mxu0 %v1759
        %2244 = vmatpush2.bf16.msra.mxu0 %v1758
        %2245 = vmatprep.subr.bf16.mxu0 %v1755
        %2246 = vmatpush2.bf16.msra.mxu0 %v1754
        %2247 = vmatprep.subr.bf16.mxu0 %v1751
        %2248 = vmatpush2.bf16.msra.mxu0 %v1750
        %2249 = vmatprep.subr.bf16.mxu0 %v1747
        %2250 = vmatpush2.bf16.msra.mxu0 %v1746
        %2251 = vmatprep.subr.bf16.mxu0 %v1743
        %2252 = vmatpush2.bf16.msra.mxu0 %v1742
        %2253 = vmatprep.mubr.bf16.mxu0 %v935
        %2254 = vmatmul.mubr.bf16.gmra.mxu0 %v934
        %v2255 = vpop.f32.mrf.mxu0
        %v2256 = vadd.f32 0.0, %v2255
        %v2257 = vpop.f32.mrf.mxu0
        %v2258 = vadd.f32 0.0, %v2257
        %v2259 = vpop.f32.mrf.mxu0
        %v2260 = vadd.f32 0.0, %v2259
        %v2261 = vpop.f32.mrf.mxu0
        %v2262 = vadd.f32 0.0, %v2261
        %2263 = vdwg.mxu0
        %2264 = vmatprep.subr.bf16.mxu0 %v1803
        %2265 = vmatpush1.bf16.msra.mxu0 %v1802
        %2266 = vmatprep.subr.bf16.mxu0 %v1799
        %2267 = vmatpush1.bf16.msra.mxu0 %v1798
        %2268 = vmatprep.subr.bf16.mxu0 %v1795
        %2269 = vmatpush1.bf16.msra.mxu0 %v1794
        %2270 = vmatprep.subr.bf16.mxu0 %v1791
        %2271 = vmatpush1.bf16.msra.mxu0 %v1790
        %2272 = vmatprep.subr.bf16.mxu0 %v1787
        %2273 = vmatpush1.bf16.msra.mxu0 %v1786
        %2274 = vmatprep.subr.bf16.mxu0 %v1783
        %2275 = vmatpush1.bf16.msra.mxu0 %v1782
        %2276 = vmatprep.subr.bf16.mxu0 %v1779
        %2277 = vmatpush1.bf16.msra.mxu0 %v1778
        %2278 = vmatprep.subr.bf16.mxu0 %v1775
        %2279 = vmatpush1.bf16.msra.mxu0 %v1774
        %2280 = vmatprep.subr.bf16.mxu0 %v1835
        %2281 = vmatpush2.bf16.msra.mxu0 %v1834
        %2282 = vmatprep.subr.bf16.mxu0 %v1831
        %2283 = vmatpush2.bf16.msra.mxu0 %v1830
        %2284 = vmatprep.subr.bf16.mxu0 %v1827
        %2285 = vmatpush2.bf16.msra.mxu0 %v1826
        %2286 = vmatprep.subr.bf16.mxu0 %v1823
        %2287 = vmatpush2.bf16.msra.mxu0 %v1822
        %2288 = vmatprep.subr.bf16.mxu0 %v1819
        %2289 = vmatpush2.bf16.msra.mxu0 %v1818
        %2290 = vmatprep.subr.bf16.mxu0 %v1815
        %2291 = vmatpush2.bf16.msra.mxu0 %v1814
        %2292 = vmatprep.subr.bf16.mxu0 %v1811
        %2293 = vmatpush2.bf16.msra.mxu0 %v1810
        %2294 = vmatprep.subr.bf16.mxu0 %v1807
        %2295 = vmatpush2.bf16.msra.mxu0 %v1806
        %2296 = vmatprep.mubr.bf16.mxu0 %v937
        %2297 = vmatmul.mubr.bf16.gmra.mxu0 %v936
        %v2298 = vpop.f32.mrf.mxu0
        %v2299 = vadd.f32 %v2256, %v2298
        %v2300 = vpop.f32.mrf.mxu0
        %v2301 = vadd.f32 %v2258, %v2300
        %v2302 = vpop.f32.mrf.mxu0
        %v2303 = vadd.f32 %v2260, %v2302
        %v2304 = vpop.f32.mrf.mxu0
        %v2305 = vadd.f32 %v2262, %v2304
        %2306 = vdwg.mxu0
        %2307 = vmatprep.subr.bf16.mxu0 %v1867
        %2308 = vmatpush1.bf16.msra.mxu0 %v1866
        %2309 = vmatprep.subr.bf16.mxu0 %v1863
        %2310 = vmatpush1.bf16.msra.mxu0 %v1862
        %2311 = vmatprep.subr.bf16.mxu0 %v1859
        %2312 = vmatpush1.bf16.msra.mxu0 %v1858
        %2313 = vmatprep.subr.bf16.mxu0 %v1855
        %2314 = vmatpush1.bf16.msra.mxu0 %v1854
        %2315 = vmatprep.subr.bf16.mxu0 %v1851
        %2316 = vmatpush1.bf16.msra.mxu0 %v1850
        %2317 = vmatprep.subr.bf16.mxu0 %v1847
        %2318 = vmatpush1.bf16.msra.mxu0 %v1846
        %2319 = vmatprep.subr.bf16.mxu0 %v1843
        %2320 = vmatpush1.bf16.msra.mxu0 %v1842
        %2321 = vmatprep.subr.bf16.mxu0 %v1839
        %2322 = vmatpush1.bf16.msra.mxu0 %v1838
        %2323 = vmatprep.subr.bf16.mxu0 %v1899
        %2324 = vmatpush2.bf16.msra.mxu0 %v1898
        %2325 = vmatprep.subr.bf16.mxu0 %v1895
        %2326 = vmatpush2.bf16.msra.mxu0 %v1894
        %2327 = vmatprep.subr.bf16.mxu0 %v1891
        %2328 = vmatpush2.bf16.msra.mxu0 %v1890
        %2329 = vmatprep.subr.bf16.mxu0 %v1887
        %2330 = vmatpush2.bf16.msra.mxu0 %v1886
        %2331 = vmatprep.subr.bf16.mxu0 %v1883
        %2332 = vmatpush2.bf16.msra.mxu0 %v1882
        %2333 = vmatprep.subr.bf16.mxu0 %v1879
        %2334 = vmatpush2.bf16.msra.mxu0 %v1878
        %2335 = vmatprep.subr.bf16.mxu0 %v1875
        %2336 = vmatpush2.bf16.msra.mxu0 %v1874
        %2337 = vmatprep.subr.bf16.mxu0 %v1871
        %2338 = vmatpush2.bf16.msra.mxu0 %v1870
        %2339 = vmatprep.mubr.bf16.mxu0 %v939
        %2340 = vmatmul.mubr.bf16.gmra.mxu0 %v938
        %v2341 = vpop.f32.mrf.mxu0
        %v2342 = vadd.f32 %v2299, %v2341
        %v2343 = vpop.f32.mrf.mxu0
        %v2344 = vadd.f32 %v2301, %v2343
        %v2345 = vpop.f32.mrf.mxu0
        %v2346 = vadd.f32 %v2303, %v2345
        %v2347 = vpop.f32.mrf.mxu0
        %v2348 = vadd.f32 %v2305, %v2347
        %2349 = vdwg.mxu0
        %v2382 = vunpack.c.l.b16 %v444
        %v2383 = vunpack.c.h.b16 %v444
        %v2384 = vunpack.c.l.b16 %v445
        %v2385 = vunpack.c.h.b16 %v445
        %v2386 = vunpack.c.l.b16 %v446
        %v2387 = vunpack.c.h.b16 %v446
        %v2388 = vunpack.c.l.b16 %v447
        %v2389 = vunpack.c.h.b16 %v447
        %v2390 = vunpack.c.l.b16 %v448
        %v2391 = vunpack.c.h.b16 %v448
        %v2392 = vunpack.c.l.b16 %v449
        %v2393 = vunpack.c.h.b16 %v449
        %v2394 = vunpack.c.l.b16 %v450
        %v2395 = vunpack.c.h.b16 %v450
        %v2396 = vunpack.c.l.b16 %v451
        %v2397 = vunpack.c.h.b16 %v451
        %v2398 = vunpack.c.l.b16 %v452
        %v2399 = vunpack.c.h.b16 %v452
        %v2400 = vunpack.c.l.b16 %v453
        %v2401 = vunpack.c.h.b16 %v453
        %v2402 = vunpack.c.l.b16 %v454
        %v2403 = vunpack.c.h.b16 %v454
        %v2404 = vunpack.c.l.b16 %v455
        %v2405 = vunpack.c.h.b16 %v455
        %v2406 = vunpack.c.l.b16 %v456
        %v2407 = vunpack.c.h.b16 %v456
        %v2408 = vunpack.c.l.b16 %v457
        %v2409 = vunpack.c.h.b16 %v457
        %v2410 = vunpack.c.l.b16 %v458
        %v2411 = vunpack.c.h.b16 %v458
        %v2412 = vunpack.c.l.b16 %v459
        %v2413 = vunpack.c.h.b16 %v459
        %v2414 = vunpack.c.l.b16 %v460
        %v2415 = vunpack.c.h.b16 %v460
        %v2416 = vunpack.c.l.b16 %v461
        %v2417 = vunpack.c.h.b16 %v461
        %v2418 = vunpack.c.l.b16 %v462
        %v2419 = vunpack.c.h.b16 %v462
        %v2420 = vunpack.c.l.b16 %v463
        %v2421 = vunpack.c.h.b16 %v463
        %v2422 = vunpack.c.l.b16 %v464
        %v2423 = vunpack.c.h.b16 %v464
        %v2424 = vunpack.c.l.b16 %v465
        %v2425 = vunpack.c.h.b16 %v465
        %v2426 = vunpack.c.l.b16 %v466
        %v2427 = vunpack.c.h.b16 %v466
        %v2428 = vunpack.c.l.b16 %v467
        %v2429 = vunpack.c.h.b16 %v467
        %v2430 = vunpack.c.l.b16 %v468
        %v2431 = vunpack.c.h.b16 %v468
        %v2432 = vunpack.c.l.b16 %v469
        %v2433 = vunpack.c.h.b16 %v469
        %v2434 = vunpack.c.l.b16 %v470
        %v2435 = vunpack.c.h.b16 %v470
        %v2436 = vunpack.c.l.b16 %v471
        %v2437 = vunpack.c.h.b16 %v471
        %v2438 = vunpack.c.l.b16 %v472
        %v2439 = vunpack.c.h.b16 %v472
        %v2440 = vunpack.c.l.b16 %v473
        %v2441 = vunpack.c.h.b16 %v473
        %v2442 = vunpack.c.l.b16 %v474
        %v2443 = vunpack.c.h.b16 %v474
        %v2444 = vunpack.c.l.b16 %v475
        %v2445 = vunpack.c.h.b16 %v475
        %v2446 = vpack.c.b16 %v2386, %v2382
        %v2447 = vpack.c.b16 %v2387, %v2383
        %v2448 = vpack.c.b16 %v2388, %v2384
        %v2449 = vpack.c.b16 %v2389, %v2385
        %v2450 = vpack.c.b16 %v2394, %v2390
        %v2451 = vpack.c.b16 %v2395, %v2391
        %v2452 = vpack.c.b16 %v2396, %v2392
        %v2453 = vpack.c.b16 %v2397, %v2393
        %v2454 = vpack.c.b16 %v2402, %v2398
        %v2455 = vpack.c.b16 %v2403, %v2399
        %v2456 = vpack.c.b16 %v2404, %v2400
        %v2457 = vpack.c.b16 %v2405, %v2401
        %v2458 = vpack.c.b16 %v2410, %v2406
        %v2459 = vpack.c.b16 %v2411, %v2407
        %v2460 = vpack.c.b16 %v2412, %v2408
        %v2461 = vpack.c.b16 %v2413, %v2409
        %v2462 = vpack.c.b16 %v2418, %v2414
        %v2463 = vpack.c.b16 %v2419, %v2415
        %v2464 = vpack.c.b16 %v2420, %v2416
        %v2465 = vpack.c.b16 %v2421, %v2417
        %v2466 = vpack.c.b16 %v2426, %v2422
        %v2467 = vpack.c.b16 %v2427, %v2423
        %v2468 = vpack.c.b16 %v2428, %v2424
        %v2469 = vpack.c.b16 %v2429, %v2425
        %v2470 = vpack.c.b16 %v2434, %v2430
        %v2471 = vpack.c.b16 %v2435, %v2431
        %v2472 = vpack.c.b16 %v2436, %v2432
        %v2473 = vpack.c.b16 %v2437, %v2433
        %v2474 = vpack.c.b16 %v2442, %v2438
        %v2475 = vpack.c.b16 %v2443, %v2439
        %v2476 = vpack.c.b16 %v2444, %v2440
        %v2477 = vpack.c.b16 %v2445, %v2441
        %2510 = vmatprep.subr.bf16.mxu0 %v2475
        %2511 = vmatpush1.bf16.msra.mxu0 %v2474
        %2512 = vmatprep.subr.bf16.mxu0 %v2471
        %2513 = vmatpush1.bf16.msra.mxu0 %v2470
        %2514 = vmatprep.subr.bf16.mxu0 %v2467
        %2515 = vmatpush1.bf16.msra.mxu0 %v2466
        %2516 = vmatprep.subr.bf16.mxu0 %v2463
        %2517 = vmatpush1.bf16.msra.mxu0 %v2462
        %2518 = vmatprep.subr.bf16.mxu0 %v2459
        %2519 = vmatpush1.bf16.msra.mxu0 %v2458
        %2520 = vmatprep.subr.bf16.mxu0 %v2455
        %2521 = vmatpush1.bf16.msra.mxu0 %v2454
        %2522 = vmatprep.subr.bf16.mxu0 %v2451
        %2523 = vmatpush1.bf16.msra.mxu0 %v2450
        %2524 = vmatprep.subr.bf16.mxu0 %v2447
        %2525 = vmatpush1.bf16.msra.mxu0 %v2446
        %2526 = vmatprep.subr.bf16.mxu0 0
        %2527 = vmatpush2.bf16.msra.mxu0 0
        %2528 = vmatprep.subr.bf16.mxu0 0
        %2529 = vmatpush2.bf16.msra.mxu0 0
        %2530 = vmatprep.subr.bf16.mxu0 0
        %2531 = vmatpush2.bf16.msra.mxu0 0
        %2532 = vmatprep.subr.bf16.mxu0 0
        %2533 = vmatpush2.bf16.msra.mxu0 0
        %2534 = vmatprep.subr.bf16.mxu0 0
        %2535 = vmatpush2.bf16.msra.mxu0 0
        %2536 = vmatprep.subr.bf16.mxu0 0
        %2537 = vmatpush2.bf16.msra.mxu0 0
        %2538 = vmatprep.subr.bf16.mxu0 0
        %2539 = vmatpush2.bf16.msra.mxu0 0
        %2540 = vmatprep.subr.bf16.mxu0 0
        %2541 = vmatpush2.bf16.msra.mxu0 0
        %2542 = vmatprep.mubr.bf16.mxu0 0
        %2543 = vmatmul.mubr.bf16.gmra.mxu0 %v443
        %v2544 = vpop.f32.mrf.mxu0
        %v2545 = vadd.f32 %v2213, %v2544
        %v2546 = vpop.f32.mrf.mxu0
        %v2547 = vadd.f32 %v2215, %v2546
        %v2548 = vpop.f32.mrf.mxu0
        %v2549 = vadd.f32 %v2217, %v2548
        %v2550 = vpop.f32.mrf.mxu0
        %v2551 = vadd.f32 %v2219, %v2550
        %2552 = vdwg.mxu0
        %2553 = vmatprep.subr.bf16.mxu0 %v2477
        %2554 = vmatpush1.bf16.msra.mxu0 %v2476
        %2555 = vmatprep.subr.bf16.mxu0 %v2473
        %2556 = vmatpush1.bf16.msra.mxu0 %v2472
        %2557 = vmatprep.subr.bf16.mxu0 %v2469
        %2558 = vmatpush1.bf16.msra.mxu0 %v2468
        %2559 = vmatprep.subr.bf16.mxu0 %v2465
        %2560 = vmatpush1.bf16.msra.mxu0 %v2464
        %2561 = vmatprep.subr.bf16.mxu0 %v2461
        %2562 = vmatpush1.bf16.msra.mxu0 %v2460
        %2563 = vmatprep.subr.bf16.mxu0 %v2457
        %2564 = vmatpush1.bf16.msra.mxu0 %v2456
        %2565 = vmatprep.subr.bf16.mxu0 %v2453
        %2566 = vmatpush1.bf16.msra.mxu0 %v2452
        %2567 = vmatprep.subr.bf16.mxu0 %v2449
        %2568 = vmatpush1.bf16.msra.mxu0 %v2448
        %2569 = vmatprep.subr.bf16.mxu0 0
        %2570 = vmatpush2.bf16.msra.mxu0 0
        %2571 = vmatprep.subr.bf16.mxu0 0
        %2572 = vmatpush2.bf16.msra.mxu0 0
        %2573 = vmatprep.subr.bf16.mxu0 0
        %2574 = vmatpush2.bf16.msra.mxu0 0
        %2575 = vmatprep.subr.bf16.mxu0 0
        %2576 = vmatpush2.bf16.msra.mxu0 0
        %2577 = vmatprep.subr.bf16.mxu0 0
        %2578 = vmatpush2.bf16.msra.mxu0 0
        %2579 = vmatprep.subr.bf16.mxu0 0
        %2580 = vmatpush2.bf16.msra.mxu0 0
        %2581 = vmatprep.subr.bf16.mxu0 0
        %2582 = vmatpush2.bf16.msra.mxu0 0
        %2583 = vmatprep.subr.bf16.mxu0 0
        %2584 = vmatpush2.bf16.msra.mxu0 0
        %2585 = vmatprep.mubr.bf16.mxu0 0
        %2586 = vmatmul.mubr.bf16.gmra.mxu0 %v443
        %v2587 = vpop.f32.mrf.mxu0
        %v2588 = vadd.f32 %v2342, %v2587
        %v2589 = vpop.f32.mrf.mxu0
        %v2590 = vadd.f32 %v2344, %v2589
        %v2591 = vpop.f32.mrf.mxu0
        %v2592 = vadd.f32 %v2346, %v2591
        %v2593 = vpop.f32.mrf.mxu0
        %v2594 = vadd.f32 %v2348, %v2593
        %2595 = vdwg.mxu0
        %2596 = vst [vmem:[%s410] sm:$0xff] %v2545
        %2597 = vst [vmem:[%s410 + $0x8] sm:$0xff] %v2547
        %2598 = vst [vmem:[%s410 + $0x10] sm:$0xff] %v2588
        %2599 = vst [vmem:[%s410 + $0x18] sm:$0xff] %v2590
        %2600 = vst [vmem:[%s410 + $0x20] sm:$0xff] %v2549
        %2601 = vst [vmem:[%s410 + $0x28] sm:$0xff] %v2551
        %2602 = vst [vmem:[%s410 + $0x30] sm:$0xff] %v2592
        %2603 = vst [vmem:[%s410 + $0x38] sm:$0xff] %v2594
        %s2604 = sand.u32 %s213, 1
        %s2605 = scalar_lea.sflag [#allocation4], %s2604
        %s2606 = sand.u32 %s213, 1
        %s2607 = smul.addr %s2606, 64
        %s2608 = scalar_lea.vmem [#allocation11], %s2607
        %s2609 = sand.u32 %s239, 1
        %s2610 = scalar_lea.sflag [#allocation13], %s2609
        %s2611 = sand.u32 %s239, 1
        %s2612 = smul.addr %s2611, 16
        %s2613 = scalar_lea.vmem [#allocation12], %s2612
        // Predicated region
        $region73: #{tpu_custom_call.1} parent=51 // pred_check
          %p2614 = pneg %p223
        $region74: #{tpu_custom_call.1} parent=51 // pred_check_branch
          %2616 = sbr.rel (%p2614) target = $region76
        $region75: #{tpu_custom_call.1} parent=51 // pred_region
          %s2618 = ssub.s32 1024, 1024
          %2619 = vsyncadd %s2605, %s2618
          %s2620 = smul.addr %s32, 8
          %s2621 = smul.addr %s2620, 128
          %s2622 = scalar_lea.hbm %s8, %s2621
          %s2623 = sshll.u32 %s2608, 4
          %s2624 = int_to_ptr.vmem [resolvable:$true] %s2623
          %2629 = dma.vmem_to_hbm [thread:$0]  %s2624, 1024, %s2622, %s2605, 512, 512, 32
        $region76: #{tpu_custom_call.1} parent=51 // pred_fallthru
          _
        // Predicated region
        $region77: #{tpu_custom_call.1} parent=51 // pred_check
          %p2630 = pneg %p249
        $region78: #{tpu_custom_call.1} parent=51 // pred_check_branch
          %2632 = sbr.rel (%p2630) target = $region80
        $region79: #{tpu_custom_call.1} parent=51 // pred_region
          %s2634 = ssub.s32 256, 256
          %2635 = vsyncadd %s2610, %s2634
          %s2636 = smul.addr %s32, 2
          %s2637 = smul.addr %s2636, 128
          %s2638 = scalar_lea.hbm %s9, %s2637
          %s2639 = sshll.u32 %s2613, 4
          %s2640 = int_to_ptr.vmem [resolvable:$true] %s2639
          %2645 = dma.vmem_to_hbm [thread:$0]  %s2640, 256, %s2638, %s2610, 128, 128, 8
        $region80: #{tpu_custom_call.1} parent=51 // pred_fallthru
          _
      $region52: #{tpu_custom_call.1} parent=5 // pred_fallthru
        _
      %p2646 = scmp.le.s32.totalorder 2, %s27
      // Predicated region
      $region81: #{tpu_custom_call.1} parent=5 // pred_check
        %p2647 = pneg %p2646
      $region82: #{tpu_custom_call.1} parent=5 // pred_check_branch
        %2649 = sbr.rel (%p2647) target = $region84
      $region83: #{tpu_custom_call.1} parent=5 // pred_region
        %s2650 = ssub.s32 %s27, 2
        // Predicated region
        $region85: #{tpu_custom_call.1} parent=83 // pred_check
          %p2651 = pneg %p229
        $region86: #{tpu_custom_call.1} parent=83 // pred_check_branch
          %2653 = sbr.rel (%p2651) target = $region88
        $region87: #{tpu_custom_call.1} parent=83 // pred_region
          %s2654 = sand.u32 %s214, 1
          %s2655 = scalar_lea.sflag [#allocation4], %s2654
          %s2656 = sand.u32 %s214, 1
          %s2657 = smul.addr %s2656, 64
          %s2658 = scalar_lea.vmem [#allocation11], %s2657
          %2659 = dma.done %s2655, 1024
        $region88: #{tpu_custom_call.1} parent=83 // pred_fallthru
          _
        // Predicated region
        $region89: #{tpu_custom_call.1} parent=83 // pred_check
          %p2660 = pneg %p255
        $region90: #{tpu_custom_call.1} parent=83 // pred_check_branch
          %2662 = sbr.rel (%p2660) target = $region92
        $region91: #{tpu_custom_call.1} parent=83 // pred_region
          %s2663 = sand.u32 %s240, 1
          %s2664 = scalar_lea.sflag [#allocation13], %s2663
          %s2665 = sand.u32 %s240, 1
          %s2666 = smul.addr %s2665, 16
          %s2667 = scalar_lea.vmem [#allocation12], %s2666
          %2668 = dma.done %s2664, 256
        $region92: #{tpu_custom_call.1} parent=83 // pred_fallthru
          _
      $region84: #{tpu_custom_call.1} parent=5 // pred_fallthru
        _
    $region6: #{tpu_custom_call.1} parent=1 // loop_footer
      %s31 = sadd.s32 1, %s27
    $region7: #{tpu_custom_call.1} parent=1 // loop_footer_branch
      %26 = sbr.rel target = $region3
    $region8: #{tpu_custom_call.1} parent=1 // loop_exit
      _
    %2669 = vsyncpa [#allocation3], 1
    %s2670 = scalar_lea.sflag [#allocation3], 1
    %2671 = vsyncpa %s2670, 1
    %2672 = vsyncpa [#allocation6], 1
    %2673 = vsyncpa [#allocation9], 1
    %2674 = vsyncpa [#allocation4], 1
    %s2675 = scalar_lea.sflag [#allocation4], 1
    %2676 = vsyncpa %s2675, 1
    %2677 = vsyncpa [#allocation13], 1
    %s2678 = scalar_lea.sflag [#allocation13], 1
    %2679 = vsyncpa %s2678, 1

</llo_original>
